<compile_context>
chip_gen: v6e
topology: v6e:2x2x1
jax: 0.10.0
libtpu: 0.0.40
codegen_flags: <defaults>
</compile_context>

<pallas_src>
import math

import jax
import jax.numpy as jnp
from jax.experimental import pallas as pl
from jax.experimental.pallas import tpu as pltpu

LN_EPS = 1e-5   # PyTorch LayerNorm default eps
MM_EPS = 1e-8   # masked_mean_std eps


def _ln_relu(h, g_ref, b_ref):
    """LayerNorm over features (sublane axis 0) + affine + ReLU. h: [Dout, P] f32."""
    mu = jnp.mean(h, axis=0, keepdims=True)                   # sublane reduce
    var = jnp.mean(jnp.square(h - mu), axis=0, keepdims=True)
    h = (h - mu) * jax.lax.rsqrt(var + LN_EPS)                 # rsqrt -> EUP
    return jnp.maximum(h * g_ref[...] + b_ref[...], 0.0)


def _linear_ln_relu_t(h_in, w_ref, g_ref, b_ref):
    """Transposed Linear(bias=False) -> LayerNorm(features) -> ReLU.

    h_in : [Din, P] (features on sublanes, pixels/sets on lanes), bf16.
    w_ref: [Dout, Din] bf16 (pre-transposed); g_ref/b_ref: [Dout, 1] f32.
    """
    h = jnp.dot(w_ref[...], h_in, preferred_element_type=jnp.float32)  # MXU, f32 acc
    return _ln_relu(h, g_ref, b_ref)


def pse_kernel(x_ref, mask_ref, cnt_ref, seg_ref,
               w1_ref, g1_ref, b1_ref,
               w2_ref, g2_ref, b2_ref,
               w3a_ref, w3b_ref, g3_ref, b3_ref,
               w4_ref, g4_ref, b4_ref,
               o_ref):
    # x tile: [C, P] bf16, P = tile_t * N pixels on the lane axis (lane-dense).
    x = x_ref[0]
    valid = 1.0 - mask_ref[0].astype(jnp.float32)   # [1, P], 1 = valid pixel
    num = cnt_ref[0, 0]                             # [1, tile_t] precomputed valid counts
    seg = seg_ref[...]                              # [P, tile_t] block-diag segment-sum

    # ---- mlp1: shared per-pixel MLP (bf16 MXU, f32 LN/activations) ----
    h = _linear_ln_relu_t(x, w1_ref, g1_ref, b1_ref)                        # [D1, P]
    h = _linear_ln_relu_t(h.astype(jnp.bfloat16), w2_ref, g2_ref, b2_ref)   # [D2, P]

    # ---- masked mean / std pooling over each set's N pixels ----
    # One MXU contraction over the stacked [sum(x), sum(x^2)] operand; no M=1
    # "num" dot (counts arrive precomputed from the wrapper).
    masked = h * valid                                                   # VPU, [D2, P]
    stacked = jnp.concatenate([masked, masked * h], axis=0)              # [2*D2, P]
    pooled = jnp.dot(stacked, seg, preferred_element_type=jnp.float32)   # [2*D2, tile_t]
    d2 = h.shape[0]
    s1, s2 = pooled[:d2], pooled[d2:]
    r = 1.0 / (num + MM_EPS)                       # exact; tiny [1, tile_t] divide
    mean = s1 * r
    # Algebraically equal to the reference sum(((x-mean)*mask)^2)/(num+eps);
    # the max() only guards f32 cancellation.
    var = jnp.maximum((s2 - mean * mean * (num + 2.0 * MM_EPS)) * r, 0.0)
    std = jnp.sqrt(var + MM_EPS)

    # ---- mlp2: batched over the tile_t sets on the lane axis ----
    # First layer consumes [mean; std] without materializing the concat:
    # w3 is pre-split into the halves acting on mean and on std.
    h2 = (jnp.dot(w3a_ref[...], mean.astype(jnp.bfloat16),
                  preferred_element_type=jnp.float32)
          + jnp.dot(w3b_ref[...], std.astype(jnp.bfloat16),
                    preferred_element_type=jnp.float32))                 # [H1, tile_t]
    h2 = _ln_relu(h2, g3_ref, b3_ref)
    h2 = _linear_ln_relu_t(h2.astype(jnp.bfloat16), w4_ref, g4_ref, b4_ref)  # [H2, tile_t]
    o_ref[0, 0] = h2


def _choose_tile_t(T, N, *, max_pixels=8192, max_seg_bytes=4 << 20):
    """Pixel-sets (timesteps) per grid step.

    Caps: tile_t*N <= max_pixels (DMA/grid-overhead amortization) and
    seg bytes (tile_t*N)*tile_t*4 <= max_seg_bytes per buffer (seg is
    double-buffered; defaults keep it <= 8 MiB total so v7x's 64 MiB VMEM is
    safe — v5e/v6e (128 MiB) can raise both knobs).
    """
    seg_cap = math.isqrt(max_seg_bytes // (4 * N))
    cap = min(T, max_pixels // max(N, 1), seg_cap)
    if cap >= T:
        return T                       # whole sequence: block dims == full dims
    lane_step = 128 // math.gcd(N, 128)     # keeps tile_t*N a multiple of 128
    step = 128 if cap >= 128 else lane_step  # prefer lane-dense (128-mult) tiles
    tile = (cap // step) * step
    if tile == 0:                      # pathological N: smallest lane-legal tile
        tile = min(T, lane_step)
    return tile


def pixel_set_encoder(x, img_mask, seq_mask, params, *, x_dtype=jnp.bfloat16):
    """x: [B, C, T, N]; img_mask: [B, T, N] (1 = padded pixel); seq_mask: [B, T]."""
    B, C, T, N = x.shape
    tile_t = _choose_tile_t(T, N)
    n_chunks = pl.cdiv(T, tile_t)
    T_pad = n_chunks * tile_t
    P = tile_t * N

    # Free reshape only (no transpose of the big tensor); bf16 halves HBM read.
    x2 = x.reshape(B, C, T * N).astype(x_dtype)
    mask2 = img_mask.reshape(B, 1, T * N).astype(jnp.bfloat16)   # 0/1 exact in bf16
    # Per-set valid-pixel counts via a trivial XLA reduce (kills the M=1 dot).
    counts = (1.0 - img_mask.astype(jnp.float32)).sum(axis=-1)   # [B, T]

    if T_pad != T:   # pad T so tile_t tiles it evenly; padded sets sliced off below
        x2 = jnp.pad(x2, ((0, 0), (0, 0), (0, (T_pad - T) * N)))
        mask2 = jnp.pad(mask2, ((0, 0), (0, 0), (0, (T_pad - T) * N)),
                        constant_values=1.0)
        counts = jnp.pad(counts, ((0, 0), (0, T_pad - T)))
    counts4 = counts.reshape(B, n_chunks, 1, tile_t)

    # Constant block-diagonal segment-sum matrix: seg[t*N + n, t] = 1.
    seg = (jnp.arange(P, dtype=jnp.int32)[:, None] // N
           == jnp.arange(tile_t, dtype=jnp.int32)[None, :]).astype(jnp.float32)

    # Tiny host-side weight prep: [out, in] bf16 weights, LN params as f32 columns.
    (w1, g1, b1), (w2, g2, b2), (w3, g3, b3), (w4, g4, b4) = params

    def prep_w(w):
        return w.T.astype(jnp.bfloat16)

    def prep_ln(g, b):
        return (g.reshape(-1, 1).astype(jnp.float32),
                b.reshape(-1, 1).astype(jnp.float32))

    w1t, (g1c, b1c) = prep_w(w1), prep_ln(g1, b1)
    w2t, (g2c, b2c) = prep_w(w2), prep_ln(g2, b2)
    w3t, (g3c, b3c) = prep_w(w3), prep_ln(g3, b3)
    w4t, (g4c, b4c) = prep_w(w4), prep_ln(g4, b4)
    D1, D2 = w1t.shape[0], w2t.shape[0]
    H1, H2 = w3t.shape[0], w4t.shape[0]
    w3a, w3b = w3t[:, :D2], w3t[:, D2:]     # halves acting on mean / std

    def full_spec(arr):
        nd = arr.ndim
        return pl.BlockSpec(arr.shape, lambda b, g, _nd=nd: (0,) * _nd)

    n_steps = B * n_chunks
    cost = pl.CostEstimate(
        flops=int(2 * n_steps * (P * (C * D1 + D1 * D2 + 2 * D2 * tile_t)
                                 + tile_t * (2 * D2 * H1 + H1 * H2))),
        transcendentals=int(n_steps * (2 * P + 3 * tile_t)),
        bytes_accessed=int(x2.size * x2.dtype.itemsize + mask2.size * 2
                           + counts4.size * 4 + seg.size * 4
                           + B * T_pad * H2 * 4))

    out = pl.pallas_call(
        pse_kernel,
        out_shape=jax.ShapeDtypeStruct((B, n_chunks, H2, tile_t), jnp.float32),
        grid=(B, n_chunks),
        in_specs=[
            pl.BlockSpec((1, C, P), lambda b, g: (b, 0, g)),             # x tile
            pl.BlockSpec((1, 1, P), lambda b, g: (b, 0, g)),             # img_mask tile
            pl.BlockSpec((1, 1, 1, tile_t), lambda b, g: (b, g, 0, 0)),  # valid counts
            full_spec(seg),
            full_spec(w1t), full_spec(g1c), full_spec(b1c),
            full_spec(w2t), full_spec(g2c), full_spec(b2c),
            full_spec(w3a), full_spec(w3b), full_spec(g3c), full_spec(b3c),
            full_spec(w4t), full_spec(g4c), full_spec(b4c),
        ],
        out_specs=pl.BlockSpec((1, 1, H2, tile_t), lambda b, g: (b, g, 0, 0)),
        compiler_params=pltpu.CompilerParams(
            dimension_semantics=("parallel", "parallel"),   # B*n_chunks >= 2 feeds both v7x TCs
            vmem_limit_bytes=48 * 1024 * 1024),
        cost_estimate=cost,
    )(x2, mask2, counts4, seg,
      w1t, g1c, b1c, w2t, g2c, b2c,
      w3a, w3b, g3c, b3c, w4t, g4c, b4c)

    # TODO(synk): seq_mask is accepted for API parity; LinearLayer's mask usage
    # is undefined in the reference, so it is not consumed here.
    del seq_mask
    # Tiny output relayout [B, n_chunks, H2, tile_t] -> [B, T, H2].
    out = jnp.transpose(out, (0, 1, 3, 2)).reshape(B, T_pad, H2)
    return out[:, :T, :]


def trunc_normal(key, shape, std=0.02):
    # matches trunc_normal_(std=0.02, a=-0.02, b=0.02) semantics
    return std * jax.random.truncated_normal(key, -1.0, 1.0, shape, jnp.float32)


def init_params(key, inp_dim, mlp1_dims, mlp2_dims):
    dims = [
        (inp_dim, mlp1_dims[0]),
        (mlp1_dims[0], mlp1_dims[1]),
        (mlp1_dims[1] * 2, mlp2_dims[0]),   # inter_dim = mlp1_dims[-1] * 2
        (mlp2_dims[0], mlp2_dims[1]),
    ]
    keys = jax.random.split(key, len(dims))
    params = []
    for k, (din, dout) in zip(keys, dims):
        w = trunc_normal(k, (din, dout))
        g = jnp.ones((1, dout), jnp.float32)    # LayerNorm weight
        b = jnp.zeros((1, dout), jnp.float32)   # LayerNorm bias
        params.append((w, g, b))
    return params


if __name__ == "__main__":
    key = jax.random.PRNGKey(0)
    B, C, T, N = 2, 4, 8, 16
    mlp1_dims = (32, 32)
    mlp2_dims = (64, 32)

    k_x, k_m, k_p = jax.random.split(key, 3)
    x = jax.random.normal(k_x, (B, C, T, N), jnp.float32)
    img_mask = (jax.random.uniform(k_m, (B, T, N)) < 0.3).astype(jnp.float32)
    img_mask = img_mask.at[..., 0].set(0.0)   # ensure >=1 valid pixel per (b, t)
    seq_mask = jnp.ones((B, T), jnp.float32)

    params = init_params(k_p, C, mlp1_dims, mlp2_dims)

    out = pixel_set_encoder(x, img_mask, seq_mask, params)
    out = jax.block_until_ready(out)
    assert out.shape == (B, T, mlp2_dims[-1])
    assert bool(jnp.all(jnp.isfinite(out)))
    print("KERNEL_OK")
</pallas_src>

<mosaic_0001>
module attributes {stable_mosaic.version = 11 : i64} {
  func.func @pse_kernel(%arg0: i32, %arg1: i32, %arg2: memref<1x4x128xbf16, #tpu.memory_space<vmem>>, %arg3: memref<1x1x128xbf16, #tpu.memory_space<vmem>>, %arg4: memref<1x1x1x8xf32, #tpu.memory_space<vmem>>, %arg5: memref<128x8xf32, #tpu.memory_space<vmem>>, %arg6: memref<32x4xbf16, #tpu.memory_space<vmem>>, %arg7: memref<32x1xf32, #tpu.memory_space<vmem>>, %arg8: memref<32x1xf32, #tpu.memory_space<vmem>>, %arg9: memref<32x32xbf16, #tpu.memory_space<vmem>>, %arg10: memref<32x1xf32, #tpu.memory_space<vmem>>, %arg11: memref<32x1xf32, #tpu.memory_space<vmem>>, %arg12: memref<64x32xbf16, #tpu.memory_space<vmem>>, %arg13: memref<64x32xbf16, #tpu.memory_space<vmem>>, %arg14: memref<64x1xf32, #tpu.memory_space<vmem>>, %arg15: memref<64x1xf32, #tpu.memory_space<vmem>>, %arg16: memref<32x64xbf16, #tpu.memory_space<vmem>>, %arg17: memref<32x1xf32, #tpu.memory_space<vmem>>, %arg18: memref<32x1xf32, #tpu.memory_space<vmem>>, %arg19: memref<1x1x32x8xf32, #tpu.memory_space<vmem>>) attributes {dimension_semantics = [#tpu.dimension_semantics<parallel>, #tpu.dimension_semantics<parallel>], iteration_bounds = array<i64: 2, 1>, scalar_prefetch = 0 : i64, scratch_operands = 0 : i64, tpu.core_type = #tpu.core_type<tc>, window_params = [{transform_indices = @transform_0, window_bounds = array<i64: 1, 4, 128>}, {transform_indices = @transform_1, window_bounds = array<i64: 1, 1, 128>}, {transform_indices = @transform_2, window_bounds = array<i64: 1, 1, 1, 8>}, {pipeline_mode = #tpu.pipeline_mode<synchronous>, transform_indices = @transform_3, window_bounds = array<i64: 128, 8>}, {pipeline_mode = #tpu.pipeline_mode<synchronous>, transform_indices = @transform_4, window_bounds = array<i64: 32, 4>}, {pipeline_mode = #tpu.pipeline_mode<synchronous>, transform_indices = @transform_5, window_bounds = array<i64: 32, 1>}, {pipeline_mode = #tpu.pipeline_mode<synchronous>, transform_indices = @transform_6, window_bounds = array<i64: 32, 1>}, {pipeline_mode = #tpu.pipeline_mode<synchronous>, transform_indices = @transform_7, window_bounds = array<i64: 32, 32>}, {pipeline_mode = #tpu.pipeline_mode<synchronous>, transform_indices = @transform_8, window_bounds = array<i64: 32, 1>}, {pipeline_mode = #tpu.pipeline_mode<synchronous>, transform_indices = @transform_9, window_bounds = array<i64: 32, 1>}, {pipeline_mode = #tpu.pipeline_mode<synchronous>, transform_indices = @transform_10, window_bounds = array<i64: 64, 32>}, {pipeline_mode = #tpu.pipeline_mode<synchronous>, transform_indices = @transform_11, window_bounds = array<i64: 64, 32>}, {pipeline_mode = #tpu.pipeline_mode<synchronous>, transform_indices = @transform_12, window_bounds = array<i64: 64, 1>}, {pipeline_mode = #tpu.pipeline_mode<synchronous>, transform_indices = @transform_13, window_bounds = array<i64: 64, 1>}, {pipeline_mode = #tpu.pipeline_mode<synchronous>, transform_indices = @transform_14, window_bounds = array<i64: 32, 64>}, {pipeline_mode = #tpu.pipeline_mode<synchronous>, transform_indices = @transform_15, window_bounds = array<i64: 32, 1>}, {pipeline_mode = #tpu.pipeline_mode<synchronous>, transform_indices = @transform_16, window_bounds = array<i64: 32, 1>}, {transform_indices = @transform_17, window_bounds = array<i64: 1, 1, 32, 8>}]} {
    %c0 = arith.constant 0 : index
    %c0_0 = arith.constant 0 : index
    %c0_1 = arith.constant 0 : index
    %0 = vector.load %arg2[%c0, %c0_0, %c0_1] : memref<1x4x128xbf16, #tpu.memory_space<vmem>>, vector<1x4x128xbf16>
    %1 = vector.shape_cast %0 : vector<1x4x128xbf16> to vector<4x128xbf16>
    %c0_2 = arith.constant 0 : index
    %c0_3 = arith.constant 0 : index
    %c0_4 = arith.constant 0 : index
    %2 = vector.load %arg3[%c0_2, %c0_3, %c0_4] : memref<1x1x128xbf16, #tpu.memory_space<vmem>>, vector<1x1x128xbf16>
    %3 = vector.shape_cast %2 : vector<1x1x128xbf16> to vector<1x128xbf16>
    %4 = arith.extf %3 : vector<1x128xbf16> to vector<1x128xf32>
    %cst = arith.constant 1.000000e+00 : f32
    %5 = vector.broadcast %cst : f32 to vector<1x128xf32>
    %6 = arith.subf %5, %4 : vector<1x128xf32>
    %c0_5 = arith.constant 0 : index
    %c0_6 = arith.constant 0 : index
    %c0_7 = arith.constant 0 : index
    %c0_8 = arith.constant 0 : index
    %7 = vector.load %arg4[%c0_5, %c0_6, %c0_7, %c0_8] : memref<1x1x1x8xf32, #tpu.memory_space<vmem>>, vector<1x1x1x8xf32>
    %8 = vector.shape_cast %7 : vector<1x1x1x8xf32> to vector<1x8xf32>
    %c0_9 = arith.constant 0 : index
    %c0_10 = arith.constant 0 : index
    %9 = vector.load %arg5[%c0_9, %c0_10] : memref<128x8xf32, #tpu.memory_space<vmem>>, vector<128x8xf32>
    %c0_11 = arith.constant 0 : index
    %c0_12 = arith.constant 0 : index
    %10 = vector.load %arg6[%c0_11, %c0_12] : memref<32x4xbf16, #tpu.memory_space<vmem>>, vector<32x4xbf16>
    %cst_13 = arith.constant dense<0.000000e+00> : vector<32x128xf32>
    %11 = tpu.matmul %10, %1, %cst_13 {dimension_numbers = #tpu.dot_dimension_numbers<[1], [0], [0], [1], [0, 0, 1, 1], [], []>} : vector<32x4xbf16>, vector<4x128xbf16>, vector<32x128xf32> -> vector<32x128xf32>
    %cst_14 = arith.constant dense<0.000000e+00> : vector<128xf32>
    %12 = vector.multi_reduction <add>, %11, %cst_14 [0] : vector<32x128xf32> to vector<128xf32>
    %13 = vector.shape_cast %12 : vector<128xf32> to vector<1x128xf32>
    %cst_15 = arith.constant 3.200000e+01 : f32
    %14 = vector.broadcast %cst_15 : f32 to vector<1x128xf32>
    %15 = arith.divf %13, %14 : vector<1x128xf32>
    %16 = vector.broadcast %15 : vector<1x128xf32> to vector<32x128xf32>
    %17 = arith.subf %11, %16 : vector<32x128xf32>
    %18 = arith.mulf %17, %17 : vector<32x128xf32>
    %cst_16 = arith.constant dense<0.000000e+00> : vector<128xf32>
    %19 = vector.multi_reduction <add>, %18, %cst_16 [0] : vector<32x128xf32> to vector<128xf32>
    %20 = vector.shape_cast %19 : vector<128xf32> to vector<1x128xf32>
    %cst_17 = arith.constant 3.200000e+01 : f32
    %21 = vector.broadcast %cst_17 : f32 to vector<1x128xf32>
    %22 = arith.divf %20, %21 : vector<1x128xf32>
    %23 = vector.broadcast %15 : vector<1x128xf32> to vector<32x128xf32>
    %24 = arith.subf %11, %23 : vector<32x128xf32>
    %cst_18 = arith.constant 9.99999974E-6 : f32
    %25 = vector.broadcast %cst_18 : f32 to vector<1x128xf32>
    %26 = arith.addf %22, %25 : vector<1x128xf32>
    %27 = math.rsqrt %26 : vector<1x128xf32>
    %28 = vector.broadcast %27 : vector<1x128xf32> to vector<32x128xf32>
    %29 = arith.mulf %24, %28 : vector<32x128xf32>
    %c0_19 = arith.constant 0 : index
    %c0_20 = arith.constant 0 : index
    %30 = vector.load %arg7[%c0_19, %c0_20] : memref<32x1xf32, #tpu.memory_space<vmem>>, vector<32x1xf32>
    %31 = vector.broadcast %30 : vector<32x1xf32> to vector<32x128xf32>
    %32 = arith.mulf %29, %31 : vector<32x128xf32>
    %c0_21 = arith.constant 0 : index
    %c0_22 = arith.constant 0 : index
    %33 = vector.load %arg8[%c0_21, %c0_22] : memref<32x1xf32, #tpu.memory_space<vmem>>, vector<32x1xf32>
    %34 = vector.broadcast %33 : vector<32x1xf32> to vector<32x128xf32>
    %35 = arith.addf %32, %34 : vector<32x128xf32>
    %cst_23 = arith.constant 0.000000e+00 : f32
    %36 = vector.broadcast %cst_23 : f32 to vector<32x128xf32>
    %37 = arith.maximumf %35, %36 : vector<32x128xf32>
    %38 = arith.truncf %37 : vector<32x128xf32> to vector<32x128xbf16>
    %c0_24 = arith.constant 0 : index
    %c0_25 = arith.constant 0 : index
    %39 = vector.load %arg9[%c0_24, %c0_25] : memref<32x32xbf16, #tpu.memory_space<vmem>>, vector<32x32xbf16>
    %cst_26 = arith.constant dense<0.000000e+00> : vector<32x128xf32>
    %40 = tpu.matmul %39, %38, %cst_26 {dimension_numbers = #tpu.dot_dimension_numbers<[1], [0], [0], [1], [0, 0, 1, 1], [], []>} : vector<32x32xbf16>, vector<32x128xbf16>, vector<32x128xf32> -> vector<32x128xf32>
    %cst_27 = arith.constant dense<0.000000e+00> : vector<128xf32>
    %41 = vector.multi_reduction <add>, %40, %cst_27 [0] : vector<32x128xf32> to vector<128xf32>
    %42 = vector.shape_cast %41 : vector<128xf32> to vector<1x128xf32>
    %cst_28 = arith.constant 3.200000e+01 : f32
    %43 = vector.broadcast %cst_28 : f32 to vector<1x128xf32>
    %44 = arith.divf %42, %43 : vector<1x128xf32>
    %45 = vector.broadcast %44 : vector<1x128xf32> to vector<32x128xf32>
    %46 = arith.subf %40, %45 : vector<32x128xf32>
    %47 = arith.mulf %46, %46 : vector<32x128xf32>
    %cst_29 = arith.constant dense<0.000000e+00> : vector<128xf32>
    %48 = vector.multi_reduction <add>, %47, %cst_29 [0] : vector<32x128xf32> to vector<128xf32>
    %49 = vector.shape_cast %48 : vector<128xf32> to vector<1x128xf32>
    %cst_30 = arith.constant 3.200000e+01 : f32
    %50 = vector.broadcast %cst_30 : f32 to vector<1x128xf32>
    %51 = arith.divf %49, %50 : vector<1x128xf32>
    %52 = vector.broadcast %44 : vector<1x128xf32> to vector<32x128xf32>
    %53 = arith.subf %40, %52 : vector<32x128xf32>
    %cst_31 = arith.constant 9.99999974E-6 : f32
    %54 = vector.broadcast %cst_31 : f32 to vector<1x128xf32>
    %55 = arith.addf %51, %54 : vector<1x128xf32>
    %56 = math.rsqrt %55 : vector<1x128xf32>
    %57 = vector.broadcast %56 : vector<1x128xf32> to vector<32x128xf32>
    %58 = arith.mulf %53, %57 : vector<32x128xf32>
    %c0_32 = arith.constant 0 : index
    %c0_33 = arith.constant 0 : index
    %59 = vector.load %arg10[%c0_32, %c0_33] : memref<32x1xf32, #tpu.memory_space<vmem>>, vector<32x1xf32>
    %60 = vector.broadcast %59 : vector<32x1xf32> to vector<32x128xf32>
    %61 = arith.mulf %58, %60 : vector<32x128xf32>
    %c0_34 = arith.constant 0 : index
    %c0_35 = arith.constant 0 : index
    %62 = vector.load %arg11[%c0_34, %c0_35] : memref<32x1xf32, #tpu.memory_space<vmem>>, vector<32x1xf32>
    %63 = vector.broadcast %62 : vector<32x1xf32> to vector<32x128xf32>
    %64 = arith.addf %61, %63 : vector<32x128xf32>
    %cst_36 = arith.constant 0.000000e+00 : f32
    %65 = vector.broadcast %cst_36 : f32 to vector<32x128xf32>
    %66 = arith.maximumf %64, %65 : vector<32x128xf32>
    %67 = vector.broadcast %6 : vector<1x128xf32> to vector<32x128xf32>
    %68 = arith.mulf %66, %67 : vector<32x128xf32>
    %69 = arith.mulf %68, %66 : vector<32x128xf32>
    %70 = tpu.concatenate %68, %69 in 0 : vector<32x128xf32>, vector<32x128xf32> -> vector<64x128xf32>
    %cst_37 = arith.constant dense<0.000000e+00> : vector<64x8xf32>
    %71 = tpu.matmul %70, %9, %cst_37 {dimension_numbers = #tpu.dot_dimension_numbers<[1], [0], [0], [1], [0, 0, 1, 1], [], []>} : vector<64x128xf32>, vector<128x8xf32>, vector<64x8xf32> -> vector<64x8xf32>
    %72 = vector.extract_strided_slice %71 {offsets = [0, 0], sizes = [32, 8], strides = [1, 1]} : vector<64x8xf32> to vector<32x8xf32>
    %73 = vector.extract_strided_slice %71 {offsets = [32, 0], sizes = [32, 8], strides = [1, 1]} : vector<64x8xf32> to vector<32x8xf32>
    %cst_38 = arith.constant 9.99999993E-9 : f32
    %74 = vector.broadcast %cst_38 : f32 to vector<1x8xf32>
    %75 = arith.addf %8, %74 : vector<1x8xf32>
    %cst_39 = arith.constant 1.000000e+00 : f32
    %76 = vector.broadcast %cst_39 : f32 to vector<1x8xf32>
    %77 = arith.divf %76, %75 : vector<1x8xf32>
    %78 = vector.broadcast %77 : vector<1x8xf32> to vector<32x8xf32>
    %79 = arith.mulf %72, %78 : vector<32x8xf32>
    %80 = arith.mulf %79, %79 : vector<32x8xf32>
    %cst_40 = arith.constant 2.000000e-08 : f32
    %81 = vector.broadcast %cst_40 : f32 to vector<1x8xf32>
    %82 = arith.addf %8, %81 : vector<1x8xf32>
    %83 = vector.broadcast %82 : vector<1x8xf32> to vector<32x8xf32>
    %84 = arith.mulf %80, %83 : vector<32x8xf32>
    %85 = arith.subf %73, %84 : vector<32x8xf32>
    %86 = vector.broadcast %77 : vector<1x8xf32> to vector<32x8xf32>
    %87 = arith.mulf %85, %86 : vector<32x8xf32>
    %cst_41 = arith.constant 0.000000e+00 : f32
    %88 = vector.broadcast %cst_41 : f32 to vector<32x8xf32>
    %89 = arith.maximumf %87, %88 : vector<32x8xf32>
    %cst_42 = arith.constant 9.99999993E-9 : f32
    %90 = vector.broadcast %cst_42 : f32 to vector<32x8xf32>
    %91 = arith.addf %89, %90 : vector<32x8xf32>
    %92 = math.sqrt %91 : vector<32x8xf32>
    %c0_43 = arith.constant 0 : index
    %c0_44 = arith.constant 0 : index
    %93 = vector.load %arg12[%c0_43, %c0_44] : memref<64x32xbf16, #tpu.memory_space<vmem>>, vector<64x32xbf16>
    %94 = arith.truncf %79 : vector<32x8xf32> to vector<32x8xbf16>
    %cst_45 = arith.constant dense<0.000000e+00> : vector<64x8xf32>
    %95 = tpu.matmul %93, %94, %cst_45 {dimension_numbers = #tpu.dot_dimension_numbers<[1], [0], [0], [1], [0, 0, 1, 1], [], []>} : vector<64x32xbf16>, vector<32x8xbf16>, vector<64x8xf32> -> vector<64x8xf32>
    %c0_46 = arith.constant 0 : index
    %c0_47 = arith.constant 0 : index
    %96 = vector.load %arg13[%c0_46, %c0_47] : memref<64x32xbf16, #tpu.memory_space<vmem>>, vector<64x32xbf16>
    %97 = arith.truncf %92 : vector<32x8xf32> to vector<32x8xbf16>
    %cst_48 = arith.constant dense<0.000000e+00> : vector<64x8xf32>
    %98 = tpu.matmul %96, %97, %cst_48 {dimension_numbers = #tpu.dot_dimension_numbers<[1], [0], [0], [1], [0, 0, 1, 1], [], []>} : vector<64x32xbf16>, vector<32x8xbf16>, vector<64x8xf32> -> vector<64x8xf32>
    %99 = arith.addf %95, %98 : vector<64x8xf32>
    %cst_49 = arith.constant dense<0.000000e+00> : vector<8xf32>
    %100 = vector.multi_reduction <add>, %99, %cst_49 [0] : vector<64x8xf32> to vector<8xf32>
    %101 = vector.shape_cast %100 : vector<8xf32> to vector<1x8xf32>
    %cst_50 = arith.constant 6.400000e+01 : f32
    %102 = vector.broadcast %cst_50 : f32 to vector<1x8xf32>
    %103 = arith.divf %101, %102 : vector<1x8xf32>
    %104 = vector.broadcast %103 : vector<1x8xf32> to vector<64x8xf32>
    %105 = arith.subf %99, %104 : vector<64x8xf32>
    %106 = arith.mulf %105, %105 : vector<64x8xf32>
    %cst_51 = arith.constant dense<0.000000e+00> : vector<8xf32>
    %107 = vector.multi_reduction <add>, %106, %cst_51 [0] : vector<64x8xf32> to vector<8xf32>
    %108 = vector.shape_cast %107 : vector<8xf32> to vector<1x8xf32>
    %cst_52 = arith.constant 6.400000e+01 : f32
    %109 = vector.broadcast %cst_52 : f32 to vector<1x8xf32>
    %110 = arith.divf %108, %109 : vector<1x8xf32>
    %111 = vector.broadcast %103 : vector<1x8xf32> to vector<64x8xf32>
    %112 = arith.subf %99, %111 : vector<64x8xf32>
    %cst_53 = arith.constant 9.99999974E-6 : f32
    %113 = vector.broadcast %cst_53 : f32 to vector<1x8xf32>
    %114 = arith.addf %110, %113 : vector<1x8xf32>
    %115 = math.rsqrt %114 : vector<1x8xf32>
    %116 = vector.broadcast %115 : vector<1x8xf32> to vector<64x8xf32>
    %117 = arith.mulf %112, %116 : vector<64x8xf32>
    %c0_54 = arith.constant 0 : index
    %c0_55 = arith.constant 0 : index
    %118 = vector.load %arg14[%c0_54, %c0_55] : memref<64x1xf32, #tpu.memory_space<vmem>>, vector<64x1xf32>
    %119 = vector.broadcast %118 : vector<64x1xf32> to vector<64x8xf32>
    %120 = arith.mulf %117, %119 : vector<64x8xf32>
    %c0_56 = arith.constant 0 : index
    %c0_57 = arith.constant 0 : index
    %121 = vector.load %arg15[%c0_56, %c0_57] : memref<64x1xf32, #tpu.memory_space<vmem>>, vector<64x1xf32>
    %122 = vector.broadcast %121 : vector<64x1xf32> to vector<64x8xf32>
    %123 = arith.addf %120, %122 : vector<64x8xf32>
    %cst_58 = arith.constant 0.000000e+00 : f32
    %124 = vector.broadcast %cst_58 : f32 to vector<64x8xf32>
    %125 = arith.maximumf %123, %124 : vector<64x8xf32>
    %126 = arith.truncf %125 : vector<64x8xf32> to vector<64x8xbf16>
    %c0_59 = arith.constant 0 : index
    %c0_60 = arith.constant 0 : index
    %127 = vector.load %arg16[%c0_59, %c0_60] : memref<32x64xbf16, #tpu.memory_space<vmem>>, vector<32x64xbf16>
    %cst_61 = arith.constant dense<0.000000e+00> : vector<32x8xf32>
    %128 = tpu.matmul %127, %126, %cst_61 {dimension_numbers = #tpu.dot_dimension_numbers<[1], [0], [0], [1], [0, 0, 1, 1], [], []>} : vector<32x64xbf16>, vector<64x8xbf16>, vector<32x8xf32> -> vector<32x8xf32>
    %cst_62 = arith.constant dense<0.000000e+00> : vector<8xf32>
    %129 = vector.multi_reduction <add>, %128, %cst_62 [0] : vector<32x8xf32> to vector<8xf32>
    %130 = vector.shape_cast %129 : vector<8xf32> to vector<1x8xf32>
    %cst_63 = arith.constant 3.200000e+01 : f32
    %131 = vector.broadcast %cst_63 : f32 to vector<1x8xf32>
    %132 = arith.divf %130, %131 : vector<1x8xf32>
    %133 = vector.broadcast %132 : vector<1x8xf32> to vector<32x8xf32>
    %134 = arith.subf %128, %133 : vector<32x8xf32>
    %135 = arith.mulf %134, %134 : vector<32x8xf32>
    %cst_64 = arith.constant dense<0.000000e+00> : vector<8xf32>
    %136 = vector.multi_reduction <add>, %135, %cst_64 [0] : vector<32x8xf32> to vector<8xf32>
    %137 = vector.shape_cast %136 : vector<8xf32> to vector<1x8xf32>
    %cst_65 = arith.constant 3.200000e+01 : f32
    %138 = vector.broadcast %cst_65 : f32 to vector<1x8xf32>
    %139 = arith.divf %137, %138 : vector<1x8xf32>
    %140 = vector.broadcast %132 : vector<1x8xf32> to vector<32x8xf32>
    %141 = arith.subf %128, %140 : vector<32x8xf32>
    %cst_66 = arith.constant 9.99999974E-6 : f32
    %142 = vector.broadcast %cst_66 : f32 to vector<1x8xf32>
    %143 = arith.addf %139, %142 : vector<1x8xf32>
    %144 = math.rsqrt %143 : vector<1x8xf32>
    %145 = vector.broadcast %144 : vector<1x8xf32> to vector<32x8xf32>
    %146 = arith.mulf %141, %145 : vector<32x8xf32>
    %c0_67 = arith.constant 0 : index
    %c0_68 = arith.constant 0 : index
    %147 = vector.load %arg17[%c0_67, %c0_68] : memref<32x1xf32, #tpu.memory_space<vmem>>, vector<32x1xf32>
    %148 = vector.broadcast %147 : vector<32x1xf32> to vector<32x8xf32>
    %149 = arith.mulf %146, %148 : vector<32x8xf32>
    %c0_69 = arith.constant 0 : index
    %c0_70 = arith.constant 0 : index
    %150 = vector.load %arg18[%c0_69, %c0_70] : memref<32x1xf32, #tpu.memory_space<vmem>>, vector<32x1xf32>
    %151 = vector.broadcast %150 : vector<32x1xf32> to vector<32x8xf32>
    %152 = arith.addf %149, %151 : vector<32x8xf32>
    %cst_71 = arith.constant 0.000000e+00 : f32
    %153 = vector.broadcast %cst_71 : f32 to vector<32x8xf32>
    %154 = arith.maximumf %152, %153 : vector<32x8xf32>
    %c0_72 = arith.constant 0 : index
    %c0_73 = arith.constant 0 : index
    %c0_74 = arith.constant 0 : index
    %c0_75 = arith.constant 0 : index
    %155 = vector.load %arg19[%c0_72, %c0_73, %c0_74, %c0_75] : memref<1x1x32x8xf32, #tpu.memory_space<vmem>>, vector<1x1x32x8xf32>
    %156 = vector.shape_cast %155 : vector<1x1x32x8xf32> to vector<32x8xf32>
    %157 = vector.shape_cast %154 : vector<32x8xf32> to vector<1x1x32x8xf32>
    tpu.vector_store %arg19[%c0_72, %c0_73, %c0_74, %c0_75], %157 {strides = array<i32>} : memref<1x1x32x8xf32, #tpu.memory_space<vmem>>, vector<1x1x32x8xf32>,
    return
  }
  func.func @transform_0(%arg0: i32, %arg1: i32) -> (i32, i32, i32) {
    %c0_i32 = arith.constant 0 : i32
    %c0_i32_0 = arith.constant 0 : i32
    return %arg0, %c0_i32, %arg1 : i32, i32, i32
  }
  func.func @transform_1(%arg0: i32, %arg1: i32) -> (i32, i32, i32) {
    %c0_i32 = arith.constant 0 : i32
    %c0_i32_0 = arith.constant 0 : i32
    return %arg0, %c0_i32, %arg1 : i32, i32, i32
  }
  func.func @transform_2(%arg0: i32, %arg1: i32) -> (i32, i32, i32, i32) {
    %c0_i32 = arith.constant 0 : i32
    %c0_i32_0 = arith.constant 0 : i32
    %c0_i32_1 = arith.constant 0 : i32
    return %arg0, %arg1, %c0_i32, %c0_i32_0 : i32, i32, i32, i32
  }
  func.func @transform_3(%arg0: i32, %arg1: i32) -> (i32, i32) {
    %c0_i32 = arith.constant 0 : i32
    %c0_i32_0 = arith.constant 0 : i32
    %c0_i32_1 = arith.constant 0 : i32
    return %c0_i32, %c0_i32_0 : i32, i32
  }
  func.func @transform_4(%arg0: i32, %arg1: i32) -> (i32, i32) {
    %c0_i32 = arith.constant 0 : i32
    %c0_i32_0 = arith.constant 0 : i32
    %c0_i32_1 = arith.constant 0 : i32
    return %c0_i32, %c0_i32_0 : i32, i32
  }
  func.func @transform_5(%arg0: i32, %arg1: i32) -> (i32, i32) {
    %c0_i32 = arith.constant 0 : i32
    %c0_i32_0 = arith.constant 0 : i32
    %c0_i32_1 = arith.constant 0 : i32
    return %c0_i32, %c0_i32_0 : i32, i32
  }
  func.func @transform_6(%arg0: i32, %arg1: i32) -> (i32, i32) {
    %c0_i32 = arith.constant 0 : i32
    %c0_i32_0 = arith.constant 0 : i32
    %c0_i32_1 = arith.constant 0 : i32
    return %c0_i32, %c0_i32_0 : i32, i32
  }
  func.func @transform_7(%arg0: i32, %arg1: i32) -> (i32, i32) {
    %c0_i32 = arith.constant 0 : i32
    %c0_i32_0 = arith.constant 0 : i32
    %c0_i32_1 = arith.constant 0 : i32
    return %c0_i32, %c0_i32_0 : i32, i32
  }
  func.func @transform_8(%arg0: i32, %arg1: i32) -> (i32, i32) {
    %c0_i32 = arith.constant 0 : i32
    %c0_i32_0 = arith.constant 0 : i32
    %c0_i32_1 = arith.constant 0 : i32
    return %c0_i32, %c0_i32_0 : i32, i32
  }
  func.func @transform_9(%arg0: i32, %arg1: i32) -> (i32, i32) {
    %c0_i32 = arith.constant 0 : i32
    %c0_i32_0 = arith.constant 0 : i32
    %c0_i32_1 = arith.constant 0 : i32
    return %c0_i32, %c0_i32_0 : i32, i32
  }
  func.func @transform_10(%arg0: i32, %arg1: i32) -> (i32, i32) {
    %c0_i32 = arith.constant 0 : i32
    %c0_i32_0 = arith.constant 0 : i32
    %c0_i32_1 = arith.constant 0 : i32
    return %c0_i32, %c0_i32_0 : i32, i32
  }
  func.func @transform_11(%arg0: i32, %arg1: i32) -> (i32, i32) {
    %c0_i32 = arith.constant 0 : i32
    %c0_i32_0 = arith.constant 0 : i32
    %c0_i32_1 = arith.constant 0 : i32
    return %c0_i32, %c0_i32_0 : i32, i32
  }
  func.func @transform_12(%arg0: i32, %arg1: i32) -> (i32, i32) {
    %c0_i32 = arith.constant 0 : i32
    %c0_i32_0 = arith.constant 0 : i32
    %c0_i32_1 = arith.constant 0 : i32
    return %c0_i32, %c0_i32_0 : i32, i32
  }
  func.func @transform_13(%arg0: i32, %arg1: i32) -> (i32, i32) {
    %c0_i32 = arith.constant 0 : i32
    %c0_i32_0 = arith.constant 0 : i32
    %c0_i32_1 = arith.constant 0 : i32
    return %c0_i32, %c0_i32_0 : i32, i32
  }
  func.func @transform_14(%arg0: i32, %arg1: i32) -> (i32, i32) {
    %c0_i32 = arith.constant 0 : i32
    %c0_i32_0 = arith.constant 0 : i32
    %c0_i32_1 = arith.constant 0 : i32
    return %c0_i32, %c0_i32_0 : i32, i32
  }
  func.func @transform_15(%arg0: i32, %arg1: i32) -> (i32, i32) {
    %c0_i32 = arith.constant 0 : i32
    %c0_i32_0 = arith.constant 0 : i32
    %c0_i32_1 = arith.constant 0 : i32
    return %c0_i32, %c0_i32_0 : i32, i32
  }
  func.func @transform_16(%arg0: i32, %arg1: i32) -> (i32, i32) {
    %c0_i32 = arith.constant 0 : i32
    %c0_i32_0 = arith.constant 0 : i32
    %c0_i32_1 = arith.constant 0 : i32
    return %c0_i32, %c0_i32_0 : i32, i32
  }
  func.func @transform_17(%arg0: i32, %arg1: i32) -> (i32, i32, i32, i32) {
    %c0_i32 = arith.constant 0 : i32
    %c0_i32_0 = arith.constant 0 : i32
    %c0_i32_1 = arith.constant 0 : i32
    return %arg0, %arg1, %c0_i32, %c0_i32_0 : i32, i32, i32, i32
  }
}

</mosaic_0001>

<llo_original>
// kernel: tpu_custom_call.1
$region0: #{tpu_custom_call.1}
  #allocation0 [shape = 'u32[]', space=smem, size = 0x4, offset = 0x4, fixed_abs, tag = 'smem constant byte address 0x4 - core index']
  #allocation1 [shape = 'u32[144,128]{1,0:T(1,128)}', space=vmem, size = 0x12000, scoped, tag = 'internal scratch']
  %s0 = inlined_call_operand.vmem [shape: bf16[2,4,128], index: 0, kind: input, shape index: {}]
  %s1 = inlined_call_operand.vmem [shape: bf16[2,1,128], index: 1, kind: input, shape index: {}]
  %s2 = inlined_call_operand.vmem [shape: f32[2,1,1,8], index: 2, kind: input, shape index: {}]
  %s3 = inlined_call_operand.vmem [shape: f32[128,8], index: 3, kind: input, shape index: {}]
  %s4 = inlined_call_operand.vmem [shape: bf16[32,4], index: 4, kind: input, shape index: {}]
  %s5 = inlined_call_operand.vmem [shape: f32[32,1], index: 5, kind: input, shape index: {}]
  %s6 = inlined_call_operand.vmem [shape: f32[32,1], index: 6, kind: input, shape index: {}]
  %s7 = inlined_call_operand.vmem [shape: bf16[32,32], index: 7, kind: input, shape index: {}]
  %s8 = inlined_call_operand.vmem [shape: f32[32,1], index: 8, kind: input, shape index: {}]
  %s9 = inlined_call_operand.vmem [shape: f32[32,1], index: 9, kind: input, shape index: {}]
  %s10 = inlined_call_operand.vmem [shape: bf16[64,32], index: 10, kind: input, shape index: {}]
  %s11 = inlined_call_operand.vmem [shape: bf16[64,32], index: 11, kind: input, shape index: {}]
  %s12 = inlined_call_operand.vmem [shape: f32[64,1], index: 12, kind: input, shape index: {}]
  %s13 = inlined_call_operand.vmem [shape: f32[64,1], index: 13, kind: input, shape index: {}]
  %s14 = inlined_call_operand.vmem [shape: bf16[32,64], index: 14, kind: input, shape index: {}]
  %s15 = inlined_call_operand.vmem [shape: f32[32,1], index: 15, kind: input, shape index: {}]
  %s16 = inlined_call_operand.vmem [shape: f32[32,1], index: 16, kind: input, shape index: {}]
  %s17 = inlined_call_operand.vmem [shape: f32[2,1,32,8], index: 17, kind: output, shape index: {}]
  %s18 = sld [smem:[#allocation0]]
  $region101: #{tpu_custom_call.1} parent=0
    _
  %s20 = ssub.s32 1, %s18
  %s21 = scalar_select 0, %s20, %s18
  loop: start=0, step=1, limit=4
  $region2: #{tpu_custom_call.1} parent=0 // loop_pre_header
    _
  $region3: #{tpu_custom_call.1} parent=0 // loop_header
    %s23 = sphi 0, %s27
    %p24 = scmp.ge.s32.totalorder %s23, 4
    %s30 = sphi 0, %s42
    %s31 = sphi 0, %s38
    %s32 = sphi 0, %s30
    %s33 = sphi 0, %s31
    %s34 = sphi 0, %s32
    %s35 = sphi 0, %s33
    %s47 = sphi 0, %s49
    %s50 = sphi 0, %s47
    %s51 = sphi 0, %s50
    %s67 = sphi 0, %s51
    %s75 = sphi 0, %s77
    %s78 = sphi 0, %s75
    %s79 = sphi 0, %s78
    %s95 = sphi 0, %s79
    %s103 = sphi 0, %s105
    %s106 = sphi 0, %s103
    %s107 = sphi 0, %s106
    %s123 = sphi 0, %s107
    %s127 = sphi 0, %s127
    %s129 = sphi 0, %s127
    %s130 = sphi 0, %s129
    %s144 = sphi 0, %s130
    %s148 = sphi 0, %s148
    %s150 = sphi 0, %s148
    %s151 = sphi 0, %s150
    %s165 = sphi 0, %s151
    %s169 = sphi 0, %s169
    %s171 = sphi 0, %s169
    %s172 = sphi 0, %s171
    %s186 = sphi 0, %s172
    %s190 = sphi 0, %s190
    %s192 = sphi 0, %s190
    %s193 = sphi 0, %s192
    %s207 = sphi 0, %s193
    %s211 = sphi 0, %s211
    %s213 = sphi 0, %s211
    %s214 = sphi 0, %s213
    %s228 = sphi 0, %s214
    %s232 = sphi 0, %s232
    %s234 = sphi 0, %s232
    %s235 = sphi 0, %s234
    %s249 = sphi 0, %s235
    %s253 = sphi 0, %s253
    %s255 = sphi 0, %s253
    %s256 = sphi 0, %s255
    %s270 = sphi 0, %s256
    %s274 = sphi 0, %s274
    %s276 = sphi 0, %s274
    %s277 = sphi 0, %s276
    %s291 = sphi 0, %s277
    %s295 = sphi 0, %s295
    %s297 = sphi 0, %s295
    %s298 = sphi 0, %s297
    %s312 = sphi 0, %s298
    %s316 = sphi 0, %s316
    %s318 = sphi 0, %s316
    %s319 = sphi 0, %s318
    %s333 = sphi 0, %s319
    %s337 = sphi 0, %s337
    %s339 = sphi 0, %s337
    %s340 = sphi 0, %s339
    %s354 = sphi 0, %s340
    %s358 = sphi 0, %s358
    %s360 = sphi 0, %s358
    %s361 = sphi 0, %s360
    %s375 = sphi 0, %s361
    %s379 = sphi 0, %s379
    %s381 = sphi 0, %s379
    %s382 = sphi 0, %s381
    %s396 = sphi 0, %s382
    %s400 = sphi 0, %s400
    %s402 = sphi 0, %s400
    %s403 = sphi 0, %s402
    %s417 = sphi 0, %s403
    %s425 = sphi 0, %s427
    %s428 = sphi 0, %s425
    %s429 = sphi 0, %s428
    %s445 = sphi 0, %s429
  $region4: #{tpu_custom_call.1} parent=0 // loop_header_branch
    %26 = sbr.rel (%p24) target = $region8
  $region5: #{tpu_custom_call.1} parent=0 // loop_body
    %s28 = ssub.s32 %s23, 1
    %s29 = ssub.s32 %s23, 2
    %s36 = sadd.s32 1, %s31
    %p37 = scmp.ge.s32.totalorder %s36, 1
    %s38 = scalar_select %p37, 0, %s36
    %s39 = sadd.s32 1, %s30
    %s40 = scalar_select %p37, %s39, %s30
    %p41 = scmp.ge.s32.totalorder %s40, 2
    %s42 = scalar_select %p41, 0, %s40
    %s43 = ssub.s32 %s30, %s42
    %s44 = ssub.s32 %s31, %s38
    %s45 = sor.u32 %s43, %s44
    %p46 = scmp.eq.s32.totalorder %s45, 0
    %s48 = sadd.s32 %s47, 1
    %s49 = scalar_select %p46, %s47, %s48
    %p52 = pneg %p46
    %p53 = scmp.eq.s32.totalorder %s23, 1
    %p54 = por %p52, %p53
    %p55 = scmp.ne.s32.totalorder %s47, %s50
    %p56 = scmp.eq.s32.totalorder %s23, 0
    %p57 = por %p55, %p56
    %p58 = scmp.ne.s32.totalorder %s47, %s50
    %p59 = scmp.eq.s32.totalorder %s28, 1
    %p60 = por %p58, %p59
    %p61 = scmp.ne.s32.totalorder %s50, %s51
    %p62 = scmp.eq.s32.totalorder %s28, 0
    %p63 = por %p61, %p62
    %p64 = scmp.ne.s32.totalorder %s50, %s51
    %p65 = scmp.eq.s32.totalorder %s29, 1
    %p66 = por %p64, %p65
    %p68 = scmp.ne.s32.totalorder %s51, %s67
    %p69 = scmp.eq.s32.totalorder %s29, 0
    %p70 = por %p68, %p69
    %s71 = ssub.s32 %s30, %s42
    %s72 = ssub.s32 %s31, %s38
    %s73 = sor.u32 %s71, %s72
    %p74 = scmp.eq.s32.totalorder %s73, 0
    %s76 = sadd.s32 %s75, 1
    %s77 = scalar_select %p74, %s75, %s76
    %p80 = pneg %p74
    %p81 = scmp.eq.s32.totalorder %s23, 1
    %p82 = por %p80, %p81
    %p83 = scmp.ne.s32.totalorder %s75, %s78
    %p84 = scmp.eq.s32.totalorder %s23, 0
    %p85 = por %p83, %p84
    %p86 = scmp.ne.s32.totalorder %s75, %s78
    %p87 = scmp.eq.s32.totalorder %s28, 1
    %p88 = por %p86, %p87
    %p89 = scmp.ne.s32.totalorder %s78, %s79
    %p90 = scmp.eq.s32.totalorder %s28, 0
    %p91 = por %p89, %p90
    %p92 = scmp.ne.s32.totalorder %s78, %s79
    %p93 = scmp.eq.s32.totalorder %s29, 1
    %p94 = por %p92, %p93
    %p96 = scmp.ne.s32.totalorder %s79, %s95
    %p97 = scmp.eq.s32.totalorder %s29, 0
    %p98 = por %p96, %p97
    %s99 = ssub.s32 %s30, %s42
    %s100 = ssub.s32 %s31, %s38
    %s101 = sor.u32 %s99, %s100
    %p102 = scmp.eq.s32.totalorder %s101, 0
    %s104 = sadd.s32 %s103, 1
    %s105 = scalar_select %p102, %s103, %s104
    %p108 = pneg %p102
    %p109 = scmp.eq.s32.totalorder %s23, 1
    %p110 = por %p108, %p109
    %p111 = scmp.ne.s32.totalorder %s103, %s106
    %p112 = scmp.eq.s32.totalorder %s23, 0
    %p113 = por %p111, %p112
    %p114 = scmp.ne.s32.totalorder %s103, %s106
    %p115 = scmp.eq.s32.totalorder %s28, 1
    %p116 = por %p114, %p115
    %p117 = scmp.ne.s32.totalorder %s106, %s107
    %p118 = scmp.eq.s32.totalorder %s28, 0
    %p119 = por %p117, %p118
    %p120 = scmp.ne.s32.totalorder %s106, %s107
    %p121 = scmp.eq.s32.totalorder %s29, 1
    %p122 = por %p120, %p121
    %p124 = scmp.ne.s32.totalorder %s107, %s123
    %p125 = scmp.eq.s32.totalorder %s29, 0
    %p126 = por %p124, %p125
    %s128 = sadd.s32 %s127, 1
    %p131 = scmp.eq.s32.totalorder %s23, 1
    %p132 = scmp.ne.s32.totalorder %s127, %s129
    %p133 = scmp.eq.s32.totalorder %s23, 0
    %p134 = por %p132, %p133
    %p135 = scmp.ne.s32.totalorder %s127, %s129
    %p136 = scmp.eq.s32.totalorder %s28, 1
    %p137 = por %p135, %p136
    %p138 = scmp.ne.s32.totalorder %s129, %s130
    %p139 = scmp.eq.s32.totalorder %s28, 0
    %p140 = por %p138, %p139
    %p141 = scmp.ne.s32.totalorder %s129, %s130
    %p142 = scmp.eq.s32.totalorder %s29, 1
    %p143 = por %p141, %p142
    %p145 = scmp.ne.s32.totalorder %s130, %s144
    %p146 = scmp.eq.s32.totalorder %s29, 0
    %p147 = por %p145, %p146
    %s149 = sadd.s32 %s148, 1
    %p152 = scmp.eq.s32.totalorder %s23, 1
    %p153 = scmp.ne.s32.totalorder %s148, %s150
    %p154 = scmp.eq.s32.totalorder %s23, 0
    %p155 = por %p153, %p154
    %p156 = scmp.ne.s32.totalorder %s148, %s150
    %p157 = scmp.eq.s32.totalorder %s28, 1
    %p158 = por %p156, %p157
    %p159 = scmp.ne.s32.totalorder %s150, %s151
    %p160 = scmp.eq.s32.totalorder %s28, 0
    %p161 = por %p159, %p160
    %p162 = scmp.ne.s32.totalorder %s150, %s151
    %p163 = scmp.eq.s32.totalorder %s29, 1
    %p164 = por %p162, %p163
    %p166 = scmp.ne.s32.totalorder %s151, %s165
    %p167 = scmp.eq.s32.totalorder %s29, 0
    %p168 = por %p166, %p167
    %s170 = sadd.s32 %s169, 1
    %p173 = scmp.eq.s32.totalorder %s23, 1
    %p174 = scmp.ne.s32.totalorder %s169, %s171
    %p175 = scmp.eq.s32.totalorder %s23, 0
    %p176 = por %p174, %p175
    %p177 = scmp.ne.s32.totalorder %s169, %s171
    %p178 = scmp.eq.s32.totalorder %s28, 1
    %p179 = por %p177, %p178
    %p180 = scmp.ne.s32.totalorder %s171, %s172
    %p181 = scmp.eq.s32.totalorder %s28, 0
    %p182 = por %p180, %p181
    %p183 = scmp.ne.s32.totalorder %s171, %s172
    %p184 = scmp.eq.s32.totalorder %s29, 1
    %p185 = por %p183, %p184
    %p187 = scmp.ne.s32.totalorder %s172, %s186
    %p188 = scmp.eq.s32.totalorder %s29, 0
    %p189 = por %p187, %p188
    %s191 = sadd.s32 %s190, 1
    %p194 = scmp.eq.s32.totalorder %s23, 1
    %p195 = scmp.ne.s32.totalorder %s190, %s192
    %p196 = scmp.eq.s32.totalorder %s23, 0
    %p197 = por %p195, %p196
    %p198 = scmp.ne.s32.totalorder %s190, %s192
    %p199 = scmp.eq.s32.totalorder %s28, 1
    %p200 = por %p198, %p199
    %p201 = scmp.ne.s32.totalorder %s192, %s193
    %p202 = scmp.eq.s32.totalorder %s28, 0
    %p203 = por %p201, %p202
    %p204 = scmp.ne.s32.totalorder %s192, %s193
    %p205 = scmp.eq.s32.totalorder %s29, 1
    %p206 = por %p204, %p205
    %p208 = scmp.ne.s32.totalorder %s193, %s207
    %p209 = scmp.eq.s32.totalorder %s29, 0
    %p210 = por %p208, %p209
    %s212 = sadd.s32 %s211, 1
    %p215 = scmp.eq.s32.totalorder %s23, 1
    %p216 = scmp.ne.s32.totalorder %s211, %s213
    %p217 = scmp.eq.s32.totalorder %s23, 0
    %p218 = por %p216, %p217
    %p219 = scmp.ne.s32.totalorder %s211, %s213
    %p220 = scmp.eq.s32.totalorder %s28, 1
    %p221 = por %p219, %p220
    %p222 = scmp.ne.s32.totalorder %s213, %s214
    %p223 = scmp.eq.s32.totalorder %s28, 0
    %p224 = por %p222, %p223
    %p225 = scmp.ne.s32.totalorder %s213, %s214
    %p226 = scmp.eq.s32.totalorder %s29, 1
    %p227 = por %p225, %p226
    %p229 = scmp.ne.s32.totalorder %s214, %s228
    %p230 = scmp.eq.s32.totalorder %s29, 0
    %p231 = por %p229, %p230
    %s233 = sadd.s32 %s232, 1
    %p236 = scmp.eq.s32.totalorder %s23, 1
    %p237 = scmp.ne.s32.totalorder %s232, %s234
    %p238 = scmp.eq.s32.totalorder %s23, 0
    %p239 = por %p237, %p238
    %p240 = scmp.ne.s32.totalorder %s232, %s234
    %p241 = scmp.eq.s32.totalorder %s28, 1
    %p242 = por %p240, %p241
    %p243 = scmp.ne.s32.totalorder %s234, %s235
    %p244 = scmp.eq.s32.totalorder %s28, 0
    %p245 = por %p243, %p244
    %p246 = scmp.ne.s32.totalorder %s234, %s235
    %p247 = scmp.eq.s32.totalorder %s29, 1
    %p248 = por %p246, %p247
    %p250 = scmp.ne.s32.totalorder %s235, %s249
    %p251 = scmp.eq.s32.totalorder %s29, 0
    %p252 = por %p250, %p251
    %s254 = sadd.s32 %s253, 1
    %p257 = scmp.eq.s32.totalorder %s23, 1
    %p258 = scmp.ne.s32.totalorder %s253, %s255
    %p259 = scmp.eq.s32.totalorder %s23, 0
    %p260 = por %p258, %p259
    %p261 = scmp.ne.s32.totalorder %s253, %s255
    %p262 = scmp.eq.s32.totalorder %s28, 1
    %p263 = por %p261, %p262
    %p264 = scmp.ne.s32.totalorder %s255, %s256
    %p265 = scmp.eq.s32.totalorder %s28, 0
    %p266 = por %p264, %p265
    %p267 = scmp.ne.s32.totalorder %s255, %s256
    %p268 = scmp.eq.s32.totalorder %s29, 1
    %p269 = por %p267, %p268
    %p271 = scmp.ne.s32.totalorder %s256, %s270
    %p272 = scmp.eq.s32.totalorder %s29, 0
    %p273 = por %p271, %p272
    %s275 = sadd.s32 %s274, 1
    %p278 = scmp.eq.s32.totalorder %s23, 1
    %p279 = scmp.ne.s32.totalorder %s274, %s276
    %p280 = scmp.eq.s32.totalorder %s23, 0
    %p281 = por %p279, %p280
    %p282 = scmp.ne.s32.totalorder %s274, %s276
    %p283 = scmp.eq.s32.totalorder %s28, 1
    %p284 = por %p282, %p283
    %p285 = scmp.ne.s32.totalorder %s276, %s277
    %p286 = scmp.eq.s32.totalorder %s28, 0
    %p287 = por %p285, %p286
    %p288 = scmp.ne.s32.totalorder %s276, %s277
    %p289 = scmp.eq.s32.totalorder %s29, 1
    %p290 = por %p288, %p289
    %p292 = scmp.ne.s32.totalorder %s277, %s291
    %p293 = scmp.eq.s32.totalorder %s29, 0
    %p294 = por %p292, %p293
    %s296 = sadd.s32 %s295, 1
    %p299 = scmp.eq.s32.totalorder %s23, 1
    %p300 = scmp.ne.s32.totalorder %s295, %s297
    %p301 = scmp.eq.s32.totalorder %s23, 0
    %p302 = por %p300, %p301
    %p303 = scmp.ne.s32.totalorder %s295, %s297
    %p304 = scmp.eq.s32.totalorder %s28, 1
    %p305 = por %p303, %p304
    %p306 = scmp.ne.s32.totalorder %s297, %s298
    %p307 = scmp.eq.s32.totalorder %s28, 0
    %p308 = por %p306, %p307
    %p309 = scmp.ne.s32.totalorder %s297, %s298
    %p310 = scmp.eq.s32.totalorder %s29, 1
    %p311 = por %p309, %p310
    %p313 = scmp.ne.s32.totalorder %s298, %s312
    %p314 = scmp.eq.s32.totalorder %s29, 0
    %p315 = por %p313, %p314
    %s317 = sadd.s32 %s316, 1
    %p320 = scmp.eq.s32.totalorder %s23, 1
    %p321 = scmp.ne.s32.totalorder %s316, %s318
    %p322 = scmp.eq.s32.totalorder %s23, 0
    %p323 = por %p321, %p322
    %p324 = scmp.ne.s32.totalorder %s316, %s318
    %p325 = scmp.eq.s32.totalorder %s28, 1
    %p326 = por %p324, %p325
    %p327 = scmp.ne.s32.totalorder %s318, %s319
    %p328 = scmp.eq.s32.totalorder %s28, 0
    %p329 = por %p327, %p328
    %p330 = scmp.ne.s32.totalorder %s318, %s319
    %p331 = scmp.eq.s32.totalorder %s29, 1
    %p332 = por %p330, %p331
    %p334 = scmp.ne.s32.totalorder %s319, %s333
    %p335 = scmp.eq.s32.totalorder %s29, 0
    %p336 = por %p334, %p335
    %s338 = sadd.s32 %s337, 1
    %p341 = scmp.eq.s32.totalorder %s23, 1
    %p342 = scmp.ne.s32.totalorder %s337, %s339
    %p343 = scmp.eq.s32.totalorder %s23, 0
    %p344 = por %p342, %p343
    %p345 = scmp.ne.s32.totalorder %s337, %s339
    %p346 = scmp.eq.s32.totalorder %s28, 1
    %p347 = por %p345, %p346
    %p348 = scmp.ne.s32.totalorder %s339, %s340
    %p349 = scmp.eq.s32.totalorder %s28, 0
    %p350 = por %p348, %p349
    %p351 = scmp.ne.s32.totalorder %s339, %s340
    %p352 = scmp.eq.s32.totalorder %s29, 1
    %p353 = por %p351, %p352
    %p355 = scmp.ne.s32.totalorder %s340, %s354
    %p356 = scmp.eq.s32.totalorder %s29, 0
    %p357 = por %p355, %p356
    %s359 = sadd.s32 %s358, 1
    %p362 = scmp.eq.s32.totalorder %s23, 1
    %p363 = scmp.ne.s32.totalorder %s358, %s360
    %p364 = scmp.eq.s32.totalorder %s23, 0
    %p365 = por %p363, %p364
    %p366 = scmp.ne.s32.totalorder %s358, %s360
    %p367 = scmp.eq.s32.totalorder %s28, 1
    %p368 = por %p366, %p367
    %p369 = scmp.ne.s32.totalorder %s360, %s361
    %p370 = scmp.eq.s32.totalorder %s28, 0
    %p371 = por %p369, %p370
    %p372 = scmp.ne.s32.totalorder %s360, %s361
    %p373 = scmp.eq.s32.totalorder %s29, 1
    %p374 = por %p372, %p373
    %p376 = scmp.ne.s32.totalorder %s361, %s375
    %p377 = scmp.eq.s32.totalorder %s29, 0
    %p378 = por %p376, %p377
    %s380 = sadd.s32 %s379, 1
    %p383 = scmp.eq.s32.totalorder %s23, 1
    %p384 = scmp.ne.s32.totalorder %s379, %s381
    %p385 = scmp.eq.s32.totalorder %s23, 0
    %p386 = por %p384, %p385
    %p387 = scmp.ne.s32.totalorder %s379, %s381
    %p388 = scmp.eq.s32.totalorder %s28, 1
    %p389 = por %p387, %p388
    %p390 = scmp.ne.s32.totalorder %s381, %s382
    %p391 = scmp.eq.s32.totalorder %s28, 0
    %p392 = por %p390, %p391
    %p393 = scmp.ne.s32.totalorder %s381, %s382
    %p394 = scmp.eq.s32.totalorder %s29, 1
    %p395 = por %p393, %p394
    %p397 = scmp.ne.s32.totalorder %s382, %s396
    %p398 = scmp.eq.s32.totalorder %s29, 0
    %p399 = por %p397, %p398
    %s401 = sadd.s32 %s400, 1
    %p404 = scmp.eq.s32.totalorder %s23, 1
    %p405 = scmp.ne.s32.totalorder %s400, %s402
    %p406 = scmp.eq.s32.totalorder %s23, 0
    %p407 = por %p405, %p406
    %p408 = scmp.ne.s32.totalorder %s400, %s402
    %p409 = scmp.eq.s32.totalorder %s28, 1
    %p410 = por %p408, %p409
    %p411 = scmp.ne.s32.totalorder %s402, %s403
    %p412 = scmp.eq.s32.totalorder %s28, 0
    %p413 = por %p411, %p412
    %p414 = scmp.ne.s32.totalorder %s402, %s403
    %p415 = scmp.eq.s32.totalorder %s29, 1
    %p416 = por %p414, %p415
    %p418 = scmp.ne.s32.totalorder %s403, %s417
    %p419 = scmp.eq.s32.totalorder %s29, 0
    %p420 = por %p418, %p419
    %s421 = ssub.s32 %s30, %s42
    %s422 = ssub.s32 %s31, %s38
    %s423 = sor.u32 %s421, %s422
    %p424 = scmp.eq.s32.totalorder %s423, 0
    %s426 = sadd.s32 %s425, 1
    %s427 = scalar_select %p424, %s425, %s426
    %p430 = pneg %p424
    %p431 = scmp.eq.s32.totalorder %s23, 1
    %p432 = por %p430, %p431
    %p433 = scmp.ne.s32.totalorder %s425, %s428
    %p434 = scmp.eq.s32.totalorder %s23, 0
    %p435 = por %p433, %p434
    %p436 = scmp.ne.s32.totalorder %s425, %s428
    %p437 = scmp.eq.s32.totalorder %s28, 1
    %p438 = por %p436, %p437
    %p439 = scmp.ne.s32.totalorder %s428, %s429
    %p440 = scmp.eq.s32.totalorder %s28, 0
    %p441 = por %p439, %p440
    %p442 = scmp.ne.s32.totalorder %s428, %s429
    %p443 = scmp.eq.s32.totalorder %s29, 1
    %p444 = por %p442, %p443
    %p446 = scmp.ne.s32.totalorder %s429, %s445
    %p447 = scmp.eq.s32.totalorder %s29, 0
    %p448 = por %p446, %p447
    %p449 = scmp.le.s32.totalorder 1, %s23
    %p450 = scmp.lt.s32.totalorder %s23, 3
    %p451 = pnand %p449, %p450
    %p452 = pneg %p451
    // Predicated region
    $region9: #{tpu_custom_call.1} parent=5 // pred_check
      _
    $region10: #{tpu_custom_call.1} parent=5 // pred_check_branch
      %454 = sbr.rel (%p451) target = $region12
    $region11: #{tpu_custom_call.1} parent=5 // pred_region
      %s455 = ssub.s32 %s23, 1
      // Predicated region
      $region13: #{tpu_custom_call.1} parent=11 // pred_check
        %p456 = pneg %p140
      $region14: #{tpu_custom_call.1} parent=11 // pred_check_branch
        %458 = sbr.rel (%p456) target = $region16
      $region15: #{tpu_custom_call.1} parent=11 // pred_region
        _
      $region16: #{tpu_custom_call.1} parent=11 // pred_fallthru
        _
      // Predicated region
      $region17: #{tpu_custom_call.1} parent=11 // pred_check
        %p459 = pneg %p161
      $region18: #{tpu_custom_call.1} parent=11 // pred_check_branch
        %461 = sbr.rel (%p459) target = $region20
      $region19: #{tpu_custom_call.1} parent=11 // pred_region
        _
      $region20: #{tpu_custom_call.1} parent=11 // pred_fallthru
        _
      // Predicated region
      $region21: #{tpu_custom_call.1} parent=11 // pred_check
        %p462 = pneg %p182
      $region22: #{tpu_custom_call.1} parent=11 // pred_check_branch
        %464 = sbr.rel (%p462) target = $region24
      $region23: #{tpu_custom_call.1} parent=11 // pred_region
        _
      $region24: #{tpu_custom_call.1} parent=11 // pred_fallthru
        _
      // Predicated region
      $region25: #{tpu_custom_call.1} parent=11 // pred_check
        %p465 = pneg %p203
      $region26: #{tpu_custom_call.1} parent=11 // pred_check_branch
        %467 = sbr.rel (%p465) target = $region28
      $region27: #{tpu_custom_call.1} parent=11 // pred_region
        _
      $region28: #{tpu_custom_call.1} parent=11 // pred_fallthru
        _
      // Predicated region
      $region29: #{tpu_custom_call.1} parent=11 // pred_check
        %p468 = pneg %p224
      $region30: #{tpu_custom_call.1} parent=11 // pred_check_branch
        %470 = sbr.rel (%p468) target = $region32
      $region31: #{tpu_custom_call.1} parent=11 // pred_region
        _
      $region32: #{tpu_custom_call.1} parent=11 // pred_fallthru
        _
      // Predicated region
      $region33: #{tpu_custom_call.1} parent=11 // pred_check
        %p471 = pneg %p245
      $region34: #{tpu_custom_call.1} parent=11 // pred_check_branch
        %473 = sbr.rel (%p471) target = $region36
      $region35: #{tpu_custom_call.1} parent=11 // pred_region
        _
      $region36: #{tpu_custom_call.1} parent=11 // pred_fallthru
        _
      // Predicated region
      $region37: #{tpu_custom_call.1} parent=11 // pred_check
        %p474 = pneg %p266
      $region38: #{tpu_custom_call.1} parent=11 // pred_check_branch
        %476 = sbr.rel (%p474) target = $region40
      $region39: #{tpu_custom_call.1} parent=11 // pred_region
        _
      $region40: #{tpu_custom_call.1} parent=11 // pred_fallthru
        _
      // Predicated region
      $region41: #{tpu_custom_call.1} parent=11 // pred_check
        %p477 = pneg %p287
      $region42: #{tpu_custom_call.1} parent=11 // pred_check_branch
        %479 = sbr.rel (%p477) target = $region44
      $region43: #{tpu_custom_call.1} parent=11 // pred_region
        _
      $region44: #{tpu_custom_call.1} parent=11 // pred_fallthru
        _
      // Predicated region
      $region45: #{tpu_custom_call.1} parent=11 // pred_check
        %p480 = pneg %p308
      $region46: #{tpu_custom_call.1} parent=11 // pred_check_branch
        %482 = sbr.rel (%p480) target = $region48
      $region47: #{tpu_custom_call.1} parent=11 // pred_region
        _
      $region48: #{tpu_custom_call.1} parent=11 // pred_fallthru
        _
      // Predicated region
      $region49: #{tpu_custom_call.1} parent=11 // pred_check
        %p483 = pneg %p329
      $region50: #{tpu_custom_call.1} parent=11 // pred_check_branch
        %485 = sbr.rel (%p483) target = $region52
      $region51: #{tpu_custom_call.1} parent=11 // pred_region
        _
      $region52: #{tpu_custom_call.1} parent=11 // pred_fallthru
        _
      // Predicated region
      $region53: #{tpu_custom_call.1} parent=11 // pred_check
        %p486 = pneg %p350
      $region54: #{tpu_custom_call.1} parent=11 // pred_check_branch
        %488 = sbr.rel (%p486) target = $region56
      $region55: #{tpu_custom_call.1} parent=11 // pred_region
        _
      $region56: #{tpu_custom_call.1} parent=11 // pred_fallthru
        _
      // Predicated region
      $region57: #{tpu_custom_call.1} parent=11 // pred_check
        %p489 = pneg %p371
      $region58: #{tpu_custom_call.1} parent=11 // pred_check_branch
        %491 = sbr.rel (%p489) target = $region60
      $region59: #{tpu_custom_call.1} parent=11 // pred_region
        _
      $region60: #{tpu_custom_call.1} parent=11 // pred_fallthru
        _
      // Predicated region
      $region61: #{tpu_custom_call.1} parent=11 // pred_check
        %p492 = pneg %p392
      $region62: #{tpu_custom_call.1} parent=11 // pred_check_branch
        %494 = sbr.rel (%p492) target = $region64
      $region63: #{tpu_custom_call.1} parent=11 // pred_region
        _
      $region64: #{tpu_custom_call.1} parent=11 // pred_fallthru
        _
      // Predicated region
      $region65: #{tpu_custom_call.1} parent=11 // pred_check
        %p495 = pneg %p413
      $region66: #{tpu_custom_call.1} parent=11 // pred_check_branch
        %497 = sbr.rel (%p495) target = $region68
      $region67: #{tpu_custom_call.1} parent=11 // pred_region
        _
      $region68: #{tpu_custom_call.1} parent=11 // pred_fallthru
        _
    $region12: #{tpu_custom_call.1} parent=5 // pred_fallthru
      _
    %p498 = scmp.lt.s32.totalorder %s23, 2
    // Predicated region
    $region69: #{tpu_custom_call.1} parent=5 // pred_check
      %p499 = pneg %p498
    $region70: #{tpu_custom_call.1} parent=5 // pred_check_branch
      %501 = sbr.rel (%p499) target = $region72
    $region71: #{tpu_custom_call.1} parent=5 // pred_region
      // Predicated region
      $region73: #{tpu_custom_call.1} parent=71 // pred_check
        %p502 = pneg %p57
      $region74: #{tpu_custom_call.1} parent=71 // pred_check_branch
        %504 = sbr.rel (%p502) target = $region76
      $region75: #{tpu_custom_call.1} parent=71 // pred_region
        %p505 = scmp.lt.s32.totalorder %s30, 1
        %s506 = scalar_select %p505, %s30, 1
        %p507 = scmp.lt.s32.totalorder %s31, 0
        %s508 = scalar_select %p507, %s31, 0
        %s509 = sadd.s32 %s508, %s506
        %s510 = smul.addr %s509, 2
        %s511 = scalar_lea.vmem %s0, %s510
      $region76: #{tpu_custom_call.1} parent=71 // pred_fallthru
        _
      // Predicated region
      $region77: #{tpu_custom_call.1} parent=71 // pred_check
        %p512 = pneg %p85
      $region78: #{tpu_custom_call.1} parent=71 // pred_check_branch
        %514 = sbr.rel (%p512) target = $region80
      $region79: #{tpu_custom_call.1} parent=71 // pred_region
        %p515 = scmp.lt.s32.totalorder %s30, 1
        %s516 = scalar_select %p515, %s30, 1
        %p517 = scmp.lt.s32.totalorder %s31, 0
        %s518 = scalar_select %p517, %s31, 0
        %s519 = sadd.s32 %s518, %s516
        %s520 = scalar_lea.vmem %s1, %s519
      $region80: #{tpu_custom_call.1} parent=71 // pred_fallthru
        _
      // Predicated region
      $region81: #{tpu_custom_call.1} parent=71 // pred_check
        %p521 = pneg %p113
      $region82: #{tpu_custom_call.1} parent=71 // pred_check_branch
        %523 = sbr.rel (%p521) target = $region84
      $region83: #{tpu_custom_call.1} parent=71 // pred_region
        %p524 = scmp.lt.s32.totalorder %s30, 1
        %s525 = scalar_select %p524, %s30, 1
        %p526 = scmp.lt.s32.totalorder %s31, 0
        %s527 = scalar_select %p526, %s31, 0
        %s528 = sadd.s32 %s527, %s525
        %s529 = scalar_lea.vmem %s2, %s528
      $region84: #{tpu_custom_call.1} parent=71 // pred_fallthru
        _
    $region72: #{tpu_custom_call.1} parent=5 // pred_fallthru
      _
    %p530 = scmp.le.s32.totalorder 1, %s23
    %p531 = scmp.lt.s32.totalorder %s23, 3
    %p532 = pnand %p530, %p531
    %p533 = pneg %p532
    // Predicated region
    $region85: #{tpu_custom_call.1} parent=5 // pred_check
      _
    $region86: #{tpu_custom_call.1} parent=5 // pred_check_branch
      %535 = sbr.rel (%p532) target = $region88
    $region87: #{tpu_custom_call.1} parent=5 // pred_region
      %s536 = ssub.s32 %s23, 1
      %p537 = scmp.lt.s32.totalorder %s32, 1
      %s538 = scalar_select %p537, %s32, 1
      %p539 = scmp.lt.s32.totalorder %s33, 0
      %s540 = scalar_select %p539, %s33, 0
      %s541 = sadd.s32 %s540, %s538
      %s542 = smul.addr %s541, 2
      %s543 = scalar_lea.vmem %s0, %s542
      %p544 = pneg %p63
      %p545 = pneg %p60
      %p546 = scmp.lt.s32.totalorder %s32, 1
      %s547 = scalar_select %p546, %s32, 1
      %p548 = scmp.lt.s32.totalorder %s33, 0
      %s549 = scalar_select %p548, %s33, 0
      %s550 = sadd.s32 %s549, %s547
      %s551 = scalar_lea.vmem %s1, %s550
      %p552 = pneg %p91
      %p553 = pneg %p88
      %p554 = scmp.lt.s32.totalorder %s32, 1
      %s555 = scalar_select %p554, %s32, 1
      %p556 = scmp.lt.s32.totalorder %s33, 0
      %s557 = scalar_select %p556, %s33, 0
      %s558 = sadd.s32 %s557, %s555
      %s559 = scalar_lea.vmem %s2, %s558
      %p560 = pneg %p119
      %p561 = pneg %p116
      %p562 = pneg %p140
      %p563 = pneg %p137
      %p564 = pneg %p161
      %p565 = pneg %p158
      %p566 = pneg %p182
      %p567 = pneg %p179
      %p568 = pneg %p203
      %p569 = pneg %p200
      %p570 = pneg %p224
      %p571 = pneg %p221
      %p572 = pneg %p245
      %p573 = pneg %p242
      %p574 = pneg %p266
      %p575 = pneg %p263
      %p576 = pneg %p287
      %p577 = pneg %p284
      %p578 = pneg %p308
      %p579 = pneg %p305
      %p580 = pneg %p329
      %p581 = pneg %p326
      %p582 = pneg %p350
      %p583 = pneg %p347
      %p584 = pneg %p371
      %p585 = pneg %p368
      %p586 = pneg %p392
      %p587 = pneg %p389
      %p588 = pneg %p413
      %p589 = pneg %p410
      %p590 = pneg %p441
      %p591 = pneg %p438
      %p592 = scmp.lt.s32.totalorder %s32, 1
      %s593 = scalar_select %p592, %s32, 1
      %p594 = scmp.lt.s32.totalorder %s33, 0
      %s595 = scalar_select %p594, %s33, 0
      %s596 = smul.addr %s595, 4
      %s597 = smul.addr %s593, 4
      %s598 = sadd.s32 %s596, %s597
      %s599 = smul.addr %s598, 8
      %s600 = scalar_lea.vmem %s17, %s599
      %p601 = scmp.lt.s32.totalorder %s32, 1
      %s602 = scalar_select %p601, %s32, 1
      %p603 = scmp.lt.s32.totalorder %s33, 0
      %s604 = scalar_select %p603, %s33, 0
      %s605 = sadd.s32 %s604, %s602
      %s606 = smul.addr %s605, 2
      %s607 = scalar_lea.vmem %s0, %s606
      %p608 = scmp.lt.s32.totalorder %s32, 1
      %s609 = scalar_select %p608, %s32, 1
      %p610 = scmp.lt.s32.totalorder %s33, 0
      %s611 = scalar_select %p610, %s33, 0
      %s612 = sadd.s32 %s611, %s609
      %s613 = scalar_lea.vmem %s1, %s612
      %p614 = scmp.lt.s32.totalorder %s32, 1
      %s615 = scalar_select %p614, %s32, 1
      %p616 = scmp.lt.s32.totalorder %s33, 0
      %s617 = scalar_select %p616, %s33, 0
      %s618 = sadd.s32 %s617, %s615
      %s619 = scalar_lea.vmem %s2, %s618
      %p620 = scmp.lt.s32.totalorder %s32, 1
      %s621 = scalar_select %p620, %s32, 1
      %p622 = scmp.lt.s32.totalorder %s33, 0
      %s623 = scalar_select %p622, %s33, 0
      %s624 = smul.addr %s623, 4
      %s625 = smul.addr %s621, 4
      %s626 = sadd.s32 %s624, %s625
      %s627 = smul.addr %s626, 8
      %s628 = scalar_lea.vmem %s17, %s627
      %v630 = vld [vmem:[%s607] sm:$0x3]
      %v631 = vld [vmem:[%s613] sm:$0x1]
      %v632 = vunpack.c.l.bf16 %v631
      %v633 = vsub.f32 1.0, %v632
      %v634 = vld [vmem:[%s619] sm:$0x1]
      %v635 = vld [vmem:[%s3] sm:$0xff]
      %v636 = vld [vmem:[%s3 + $0x8] sm:$0xff]
      %v637 = vld [vmem:[%s3 + $0x10] sm:$0xff]
      %v638 = vld [vmem:[%s3 + $0x18] sm:$0xff]
      %v639 = vld [vmem:[%s3 + $0x20] sm:$0xff]
      %v640 = vld [vmem:[%s3 + $0x28] sm:$0xff]
      %v641 = vld [vmem:[%s3 + $0x30] sm:$0xff]
      %v642 = vld [vmem:[%s3 + $0x38] sm:$0xff]
      %v643 = vld [vmem:[%s3 + $0x40] sm:$0xff]
      %v644 = vld [vmem:[%s3 + $0x48] sm:$0xff]
      %v645 = vld [vmem:[%s3 + $0x50] sm:$0xff]
      %v646 = vld [vmem:[%s3 + $0x58] sm:$0xff]
      %v647 = vld [vmem:[%s3 + $0x60] sm:$0xff]
      %v648 = vld [vmem:[%s3 + $0x68] sm:$0xff]
      %v649 = vld [vmem:[%s3 + $0x70] sm:$0xff]
      %v650 = vld [vmem:[%s3 + $0x78] sm:$0xff]
      %v651 = vld [vmem:[%s4] sm:$0xf]
      %v652 = vld [vmem:[%s4 + $0x4] sm:$0xf]
      %v653 = vld [vmem:[%s4 + $0x8] sm:$0xf]
      %v654 = vld [vmem:[%s4 + $0xc] sm:$0xf]
      %v659 = vunpack.c.l.b16 %v651
      %v660 = vunpack.c.l.b16 %v652
      %v661 = vunpack.c.l.b16 %v653
      %v662 = vunpack.c.l.b16 %v654
      %v663 = vpack.c.b16 %v660, %v659
      %v664 = vpack.c.b16 %v662, %v661
      %vm665 = vcmask 31744
      %v667 = vsel %vm665, %v663, 0
      %v670 = vsel %vm665, %v664, 0
      %vm672 = vcmask 1041408
      %v674 = vsel %vm672, %v630, 0
      %676 = vmatprep.subr.bf16.mxu0 0
      %677 = vmatpush1.bf16.msra.mxu0 0
      %678 = vmatprep.subr.bf16.mxu0 0
      %679 = vmatpush1.bf16.msra.mxu0 0
      %680 = vmatprep.subr.bf16.mxu0 0
      %681 = vmatpush1.bf16.msra.mxu0 0
      %682 = vmatprep.subr.bf16.mxu0 0
      %683 = vmatpush1.bf16.msra.mxu0 0
      %684 = vmatprep.subr.bf16.mxu0 0
      %685 = vmatpush1.bf16.msra.mxu0 0
      %686 = vmatprep.subr.bf16.mxu0 0
      %687 = vmatpush1.bf16.msra.mxu0 0
      %688 = vmatprep.subr.bf16.mxu0 0
      %689 = vmatpush1.bf16.msra.mxu0 0
      %690 = vmatprep.subr.bf16.mxu0 0
      %691 = vmatpush1.bf16.msra.mxu0 %v674
      %692 = vmatprep.subr.bf16.mxu0 0
      %693 = vmatpush2.bf16.msra.mxu0 0
      %694 = vmatprep.subr.bf16.mxu0 0
      %695 = vmatpush2.bf16.msra.mxu0 0
      %696 = vmatprep.subr.bf16.mxu0 0
      %697 = vmatpush2.bf16.msra.mxu0 0
      %698 = vmatprep.subr.bf16.mxu0 0
      %699 = vmatpush2.bf16.msra.mxu0 0
      %700 = vmatprep.subr.bf16.mxu0 0
      %701 = vmatpush2.bf16.msra.mxu0 0
      %702 = vmatprep.subr.bf16.mxu0 0
      %703 = vmatpush2.bf16.msra.mxu0 0
      %704 = vmatprep.subr.bf16.mxu0 0
      %705 = vmatpush2.bf16.msra.mxu0 0
      %706 = vmatprep.subr.bf16.mxu0 0
      %707 = vmatpush2.bf16.msra.mxu0 0
      %708 = vmatprep.mubr.bf16.mxu0 0
      %709 = vmatmul.mubr.bf16.gmra.mxu0 %v667
      %v710 = vpop.f32.mrf.mxu0
      %v711 = vadd.f32 0.0, %v710
      %v712 = vpop.f32.mrf.mxu0
      %v713 = vpop.f32.mrf.mxu0
      %v714 = vadd.f32 0.0, %v713
      %v715 = vpop.f32.mrf.mxu0
      %716 = vmatprep.mubr.bf16.mxu0 0
      %717 = vmatmul.mubr.bf16.gmra.mxu0 %v670
      %v718 = vpop.f32.mrf.mxu0
      %v719 = vadd.f32 0.0, %v718
      %v720 = vpop.f32.mrf.mxu0
      %v721 = vpop.f32.mrf.mxu0
      %v722 = vadd.f32 0.0, %v721
      %v723 = vpop.f32.mrf.mxu0
      %724 = vdwg.mxu0
      %v725 = vadd.f32 %v711, %v714
      %v726 = vadd.f32 %v725, %v719
      %v727 = vadd.f32 %v726, %v722
      %v728 = vrot.slane %v727, 4
      %v729 = vadd.f32 %v727, %v728
      %v730 = vrot.slane %v729, 2
      %v731 = vadd.f32 %v729, %v730
      %v732 = vrot.slane %v731, 1
      %v733 = vadd.f32 %v731, %v732
      %v734 = vrcp.pop 32.0
      %v735 = vmul.f32 %v733, %v734
      %v736 = vsub.f32 %v711, %v735
      %v737 = vsub.f32 %v714, %v735
      %v738 = vsub.f32 %v719, %v735
      %v739 = vsub.f32 %v722, %v735
      %v740 = vmul.f32 %v736, %v736
      %v741 = vmul.f32 %v737, %v737
      %v742 = vmul.f32 %v738, %v738
      %v743 = vmul.f32 %v739, %v739
      %v744 = vadd.f32 %v740, %v741
      %v745 = vadd.f32 %v744, %v742
      %v746 = vadd.f32 %v745, %v743
      %v747 = vrot.slane %v746, 4
      %v748 = vadd.f32 %v746, %v747
      %v749 = vrot.slane %v748, 2
      %v750 = vadd.f32 %v748, %v749
      %v751 = vrot.slane %v750, 1
      %v752 = vadd.f32 %v750, %v751
      %v753 = vmul.f32 %v752, %v734
      %v754 = vadd.f32 %v753, 1e-05
      %v755 = vrsqrt.pop %v754
      %v756 = vmul.f32 %v736, %v755
      %v757 = vmul.f32 %v737, %v755
      %v758 = vmul.f32 %v738, %v755
      %v759 = vmul.f32 %v739, %v755
      %v760 = vld [vmem:[%s5] sm:$0xff]
      %v761 = vld [vmem:[%s5 + $0x8] sm:$0xff]
      %v762 = vld [vmem:[%s5 + $0x10] sm:$0xff]
      %v763 = vld [vmem:[%s5 + $0x18] sm:$0xff]
      %765 = vset.pattern.permute.xlu0 0
      %766 = vperm.xlu0 %765, %v760
      %v767 = vpop.permute.xlu0 %766
      %770 = vset.pattern.permute.xlu0 0
      %771 = vperm.xlu0 %770, %v761
      %v772 = vpop.permute.xlu0 %771
      %775 = vset.pattern.permute.xlu0 0
      %776 = vperm.xlu0 %775, %v762
      %v777 = vpop.permute.xlu0 %776
      %780 = vset.pattern.permute.xlu0 0
      %781 = vperm.xlu0 %780, %v763
      %v782 = vpop.permute.xlu0 %781
      %v784 = vmul.f32 %v756, %v767
      %v785 = vmul.f32 %v757, %v772
      %v786 = vmul.f32 %v758, %v777
      %v787 = vmul.f32 %v759, %v782
      %v788 = vld [vmem:[%s6] sm:$0xff]
      %v789 = vld [vmem:[%s6 + $0x8] sm:$0xff]
      %v790 = vld [vmem:[%s6 + $0x10] sm:$0xff]
      %v791 = vld [vmem:[%s6 + $0x18] sm:$0xff]
      %793 = vset.pattern.permute.xlu0 0
      %794 = vperm.xlu0 %793, %v788
      %v795 = vpop.permute.xlu0 %794
      %798 = vset.pattern.permute.xlu0 0
      %799 = vperm.xlu0 %798, %v789
      %v800 = vpop.permute.xlu0 %799
      %803 = vset.pattern.permute.xlu0 0
      %804 = vperm.xlu0 %803, %v790
      %v805 = vpop.permute.xlu0 %804
      %808 = vset.pattern.permute.xlu0 0
      %809 = vperm.xlu0 %808, %v791
      %v810 = vpop.permute.xlu0 %809
      %v812 = vadd.f32 %v784, %v795
      %v813 = vadd.f32 %v785, %v800
      %v814 = vadd.f32 %v786, %v805
      %v815 = vadd.f32 %v787, %v810
      %v816 = vmax.f32 %v812, 0.0
      %v817 = vmax.f32 %v813, 0.0
      %v818 = vmax.f32 %v814, 0.0
      %v819 = vmax.f32 %v815, 0.0
      %v820 = vpack.c.bf16 %v817, %v816
      %v821 = vpack.c.bf16 %v819, %v818
      %v822 = vld [vmem:[%s7] sm:$0xf]
      %v823 = vld [vmem:[%s7 + $0x4] sm:$0xf]
      %v824 = vld [vmem:[%s7 + $0x8] sm:$0xf]
      %v825 = vld [vmem:[%s7 + $0xc] sm:$0xf]
      %v830 = vunpack.c.l.b16 %v822
      %v831 = vunpack.c.l.b16 %v823
      %v832 = vunpack.c.l.b16 %v824
      %v833 = vunpack.c.l.b16 %v825
      %v834 = vpack.c.b16 %v831, %v830
      %v835 = vpack.c.b16 %v833, %v832
      %vm836 = vcmask 261120
      %v838 = vsel %vm836, %v834, 0
      %v841 = vsel %vm836, %v835, 0
      %843 = vmatprep.subr.bf16.mxu0 0
      %844 = vmatpush1.bf16.msra.mxu0 0
      %845 = vmatprep.subr.bf16.mxu0 0
      %846 = vmatpush1.bf16.msra.mxu0 0
      %847 = vmatprep.subr.bf16.mxu0 0
      %848 = vmatpush1.bf16.msra.mxu0 0
      %849 = vmatprep.subr.bf16.mxu0 0
      %850 = vmatpush1.bf16.msra.mxu0 0
      %851 = vmatprep.subr.bf16.mxu0 0
      %852 = vmatpush1.bf16.msra.mxu0 0
      %853 = vmatprep.subr.bf16.mxu0 0
      %854 = vmatpush1.bf16.msra.mxu0 0
      %855 = vmatprep.subr.bf16.mxu0 0
      %856 = vmatpush1.bf16.msra.mxu0 %v821
      %857 = vmatprep.subr.bf16.mxu0 0
      %858 = vmatpush1.bf16.msra.mxu0 %v820
      %859 = vmatprep.subr.bf16.mxu0 0
      %860 = vmatpush2.bf16.msra.mxu0 0
      %861 = vmatprep.subr.bf16.mxu0 0
      %862 = vmatpush2.bf16.msra.mxu0 0
      %863 = vmatprep.subr.bf16.mxu0 0
      %864 = vmatpush2.bf16.msra.mxu0 0
      %865 = vmatprep.subr.bf16.mxu0 0
      %866 = vmatpush2.bf16.msra.mxu0 0
      %867 = vmatprep.subr.bf16.mxu0 0
      %868 = vmatpush2.bf16.msra.mxu0 0
      %869 = vmatprep.subr.bf16.mxu0 0
      %870 = vmatpush2.bf16.msra.mxu0 0
      %871 = vmatprep.subr.bf16.mxu0 0
      %872 = vmatpush2.bf16.msra.mxu0 0
      %873 = vmatprep.subr.bf16.mxu0 0
      %874 = vmatpush2.bf16.msra.mxu0 0
      %875 = vmatprep.mubr.bf16.mxu0 0
      %876 = vmatmul.mubr.bf16.gmra.mxu0 %v838
      %v877 = vpop.f32.mrf.mxu0
      %v878 = vadd.f32 0.0, %v877
      %v879 = vpop.f32.mrf.mxu0
      %v880 = vpop.f32.mrf.mxu0
      %v881 = vadd.f32 0.0, %v880
      %v882 = vpop.f32.mrf.mxu0
      %883 = vmatprep.mubr.bf16.mxu0 0
      %884 = vmatmul.mubr.bf16.gmra.mxu0 %v841
      %v885 = vpop.f32.mrf.mxu0
      %v886 = vadd.f32 0.0, %v885
      %v887 = vpop.f32.mrf.mxu0
      %v888 = vpop.f32.mrf.mxu0
      %v889 = vadd.f32 0.0, %v888
      %v890 = vpop.f32.mrf.mxu0
      %891 = vdwg.mxu0
      %v892 = vadd.f32 %v878, %v881
      %v893 = vadd.f32 %v892, %v886
      %v894 = vadd.f32 %v893, %v889
      %v895 = vrot.slane %v894, 4
      %v896 = vadd.f32 %v894, %v895
      %v897 = vrot.slane %v896, 2
      %v898 = vadd.f32 %v896, %v897
      %v899 = vrot.slane %v898, 1
      %v900 = vadd.f32 %v898, %v899
      %v901 = vmul.f32 %v900, %v734
      %v902 = vsub.f32 %v878, %v901
      %v903 = vsub.f32 %v881, %v901
      %v904 = vsub.f32 %v886, %v901
      %v905 = vsub.f32 %v889, %v901
      %v906 = vmul.f32 %v902, %v902
      %v907 = vmul.f32 %v903, %v903
      %v908 = vmul.f32 %v904, %v904
      %v909 = vmul.f32 %v905, %v905
      %v910 = vadd.f32 %v906, %v907
      %v911 = vadd.f32 %v910, %v908
      %v912 = vadd.f32 %v911, %v909
      %v913 = vrot.slane %v912, 4
      %v914 = vadd.f32 %v912, %v913
      %v915 = vrot.slane %v914, 2
      %v916 = vadd.f32 %v914, %v915
      %v917 = vrot.slane %v916, 1
      %v918 = vadd.f32 %v916, %v917
      %v919 = vmul.f32 %v918, %v734
      %v920 = vadd.f32 %v919, 1e-05
      %v921 = vrsqrt.pop %v920
      %v922 = vmul.f32 %v902, %v921
      %v923 = vmul.f32 %v903, %v921
      %v924 = vmul.f32 %v904, %v921
      %v925 = vmul.f32 %v905, %v921
      %v926 = vld [vmem:[%s8] sm:$0xff]
      %v927 = vld [vmem:[%s8 + $0x8] sm:$0xff]
      %v928 = vld [vmem:[%s8 + $0x10] sm:$0xff]
      %v929 = vld [vmem:[%s8 + $0x18] sm:$0xff]
      %931 = vset.pattern.permute.xlu0 0
      %932 = vperm.xlu0 %931, %v926
      %v933 = vpop.permute.xlu0 %932
      %936 = vset.pattern.permute.xlu0 0
      %937 = vperm.xlu0 %936, %v927
      %v938 = vpop.permute.xlu0 %937
      %941 = vset.pattern.permute.xlu0 0
      %942 = vperm.xlu0 %941, %v928
      %v943 = vpop.permute.xlu0 %942
      %946 = vset.pattern.permute.xlu0 0
      %947 = vperm.xlu0 %946, %v929
      %v948 = vpop.permute.xlu0 %947
      %v950 = vmul.f32 %v922, %v933
      %v951 = vmul.f32 %v923, %v938
      %v952 = vmul.f32 %v924, %v943
      %v953 = vmul.f32 %v925, %v948
      %v954 = vld [vmem:[%s9] sm:$0xff]
      %v955 = vld [vmem:[%s9 + $0x8] sm:$0xff]
      %v956 = vld [vmem:[%s9 + $0x10] sm:$0xff]
      %v957 = vld [vmem:[%s9 + $0x18] sm:$0xff]
      %959 = vset.pattern.permute.xlu0 0
      %960 = vperm.xlu0 %959, %v954
      %v961 = vpop.permute.xlu0 %960
      %964 = vset.pattern.permute.xlu0 0
      %965 = vperm.xlu0 %964, %v955
      %v966 = vpop.permute.xlu0 %965
      %969 = vset.pattern.permute.xlu0 0
      %970 = vperm.xlu0 %969, %v956
      %v971 = vpop.permute.xlu0 %970
      %974 = vset.pattern.permute.xlu0 0
      %975 = vperm.xlu0 %974, %v957
      %v976 = vpop.permute.xlu0 %975
      %v978 = vadd.f32 %v950, %v961
      %v979 = vadd.f32 %v951, %v966
      %v980 = vadd.f32 %v952, %v971
      %v981 = vadd.f32 %v953, %v976
      %v982 = vmax.f32 %v978, 0.0
      %v983 = vmax.f32 %v979, 0.0
      %v984 = vmax.f32 %v980, 0.0
      %v985 = vmax.f32 %v981, 0.0
      %v986 = vlaneseq
      %v987 = vshrl.u32 %v986, 7
      %v988 = vsub.s32 0, %v987
      %v989 = vrot.slane %v633, %v988
      %v990 = vmul.f32 %v982, %v989
      %v991 = vmul.f32 %v983, %v989
      %v992 = vmul.f32 %v984, %v989
      %v993 = vmul.f32 %v985, %v989
      %v994 = vmul.f32 %v990, %v982
      %v995 = vmul.f32 %v991, %v983
      %v996 = vmul.f32 %v992, %v984
      %v997 = vmul.f32 %v993, %v985
      %998 = vmatprep.subr.mxu0 0.0
      %999 = vmatpush1.msra.mxu0 %v650
      %1000 = vmatprep.subr.mxu0 0.0
      %1001 = vmatpush1.msra.mxu0 %v649
      %1002 = vmatprep.subr.mxu0 0.0
      %1003 = vmatpush1.msra.mxu0 %v648
      %1004 = vmatprep.subr.mxu0 0.0
      %1005 = vmatpush1.msra.mxu0 %v647
      %1006 = vmatprep.subr.mxu0 0.0
      %1007 = vmatpush1.msra.mxu0 %v646
      %1008 = vmatprep.subr.mxu0 0.0
      %1009 = vmatpush1.msra.mxu0 %v645
      %1010 = vmatprep.subr.mxu0 0.0
      %1011 = vmatpush1.msra.mxu0 %v644
      %1012 = vmatprep.subr.mxu0 0.0
      %1013 = vmatpush1.msra.mxu0 %v643
      %1014 = vmatprep.subr.mxu0 0.0
      %1015 = vmatpush1.msra.mxu0 %v642
      %1016 = vmatprep.subr.mxu0 0.0
      %1017 = vmatpush1.msra.mxu0 %v641
      %1018 = vmatprep.subr.mxu0 0.0
      %1019 = vmatpush1.msra.mxu0 %v640
      %1020 = vmatprep.subr.mxu0 0.0
      %1021 = vmatpush1.msra.mxu0 %v639
      %1022 = vmatprep.subr.mxu0 0.0
      %1023 = vmatpush1.msra.mxu0 %v638
      %1024 = vmatprep.subr.mxu0 0.0
      %1025 = vmatpush1.msra.mxu0 %v637
      %1026 = vmatprep.subr.mxu0 0.0
      %1027 = vmatpush1.msra.mxu0 %v636
      %1028 = vmatprep.subr.mxu0 0.0
      %1029 = vmatpush1.msra.mxu0 %v635
      %1030 = vmatprep.subr.mxu0 0.0
      %1031 = vmatpush2.msra.mxu0 0.0
      %1032 = vmatprep.subr.mxu0 0.0
      %1033 = vmatpush2.msra.mxu0 0.0
      %1034 = vmatprep.subr.mxu0 0.0
      %1035 = vmatpush2.msra.mxu0 0.0
      %1036 = vmatprep.subr.mxu0 0.0
      %1037 = vmatpush2.msra.mxu0 0.0
      %1038 = vmatprep.subr.mxu0 0.0
      %1039 = vmatpush2.msra.mxu0 0.0
      %1040 = vmatprep.subr.mxu0 0.0
      %1041 = vmatpush2.msra.mxu0 0.0
      %1042 = vmatprep.subr.mxu0 0.0
      %1043 = vmatpush2.msra.mxu0 0.0
      %1044 = vmatprep.subr.mxu0 0.0
      %1045 = vmatpush2.msra.mxu0 0.0
      %1046 = vmatprep.subr.mxu0 0.0
      %1047 = vmatpush2.msra.mxu0 0.0
      %1048 = vmatprep.subr.mxu0 0.0
      %1049 = vmatpush2.msra.mxu0 0.0
      %1050 = vmatprep.subr.mxu0 0.0
      %1051 = vmatpush2.msra.mxu0 0.0
      %1052 = vmatprep.subr.mxu0 0.0
      %1053 = vmatpush2.msra.mxu0 0.0
      %1054 = vmatprep.subr.mxu0 0.0
      %1055 = vmatpush2.msra.mxu0 0.0
      %1056 = vmatprep.subr.mxu0 0.0
      %1057 = vmatpush2.msra.mxu0 0.0
      %1058 = vmatprep.subr.mxu0 0.0
      %1059 = vmatpush2.msra.mxu0 0.0
      %1060 = vmatprep.subr.mxu0 0.0
      %1061 = vmatpush2.msra.mxu0 0.0
      %1062 = vmatprep.mubr.f32.mxu0 0.0
      %1063 = vmatmul.mubr.f32.gmra.mxu0 %v990
      %v1064 = vpop.f32.mrf.mxu0
      %v1065 = vadd.f32 0.0, %v1064
      %v1066 = vpop.f32.mrf.mxu0
      %1067 = vmatprep.mubr.f32.mxu0 0.0
      %1068 = vmatmul.mubr.f32.gmra.mxu0 %v991
      %v1069 = vpop.f32.mrf.mxu0
      %v1070 = vadd.f32 0.0, %v1069
      %v1071 = vpop.f32.mrf.mxu0
      %1072 = vmatprep.mubr.f32.mxu0 0.0
      %1073 = vmatmul.mubr.f32.gmra.mxu0 %v992
      %v1074 = vpop.f32.mrf.mxu0
      %v1075 = vadd.f32 0.0, %v1074
      %v1076 = vpop.f32.mrf.mxu0
      %1077 = vmatprep.mubr.f32.mxu0 0.0
      %1078 = vmatmul.mubr.f32.gmra.mxu0 %v993
      %v1079 = vpop.f32.mrf.mxu0
      %v1080 = vadd.f32 0.0, %v1079
      %v1081 = vpop.f32.mrf.mxu0
      %1082 = vmatprep.mubr.f32.mxu0 0.0
      %1083 = vmatmul.mubr.f32.gmra.mxu0 %v994
      %v1084 = vpop.f32.mrf.mxu0
      %v1085 = vadd.f32 0.0, %v1084
      %v1086 = vpop.f32.mrf.mxu0
      %1087 = vmatprep.mubr.f32.mxu0 0.0
      %1088 = vmatmul.mubr.f32.gmra.mxu0 %v995
      %v1089 = vpop.f32.mrf.mxu0
      %v1090 = vadd.f32 0.0, %v1089
      %v1091 = vpop.f32.mrf.mxu0
      %1092 = vmatprep.mubr.f32.mxu0 0.0
      %1093 = vmatmul.mubr.f32.gmra.mxu0 %v996
      %v1094 = vpop.f32.mrf.mxu0
      %v1095 = vadd.f32 0.0, %v1094
      %v1096 = vpop.f32.mrf.mxu0
      %1097 = vmatprep.mubr.f32.mxu0 0.0
      %1098 = vmatmul.mubr.f32.gmra.mxu0 %v997
      %v1099 = vpop.f32.mrf.mxu0
      %v1100 = vadd.f32 0.0, %v1099
      %v1101 = vpop.f32.mrf.mxu0
      %1102 = vdwg.mxu0
      %v1103 = vadd.f32 %v634, 1e-08
      %v1104 = vrcp.pop %v1103
      %v1105 = vmul.f32 1.0, %v1104
      %v1107 = vlaneseq
      %v1108 = vshrl.u32 %v1107, 7
      %v1109 = vsub.s32 0, %v1108
      %v1110 = vrot.slane %v1105, %v1109
      %v1112 = vmul.f32 %v1065, %v1110
      %v1113 = vmul.f32 %v1070, %v1110
      %v1114 = vmul.f32 %v1075, %v1110
      %v1115 = vmul.f32 %v1080, %v1110
      %v1116 = vmul.f32 %v1112, %v1112
      %v1117 = vmul.f32 %v1113, %v1113
      %v1118 = vmul.f32 %v1114, %v1114
      %v1119 = vmul.f32 %v1115, %v1115
      %v1120 = vadd.f32 %v634, 2e-08
      %v1122 = vlaneseq
      %v1123 = vshrl.u32 %v1122, 7
      %v1124 = vsub.s32 0, %v1123
      %v1125 = vrot.slane %v1120, %v1124
      %v1127 = vmul.f32 %v1116, %v1125
      %v1128 = vmul.f32 %v1117, %v1125
      %v1129 = vmul.f32 %v1118, %v1125
      %v1130 = vmul.f32 %v1119, %v1125
      %v1131 = vsub.f32 %v1085, %v1127
      %v1132 = vsub.f32 %v1090, %v1128
      %v1133 = vsub.f32 %v1095, %v1129
      %v1134 = vsub.f32 %v1100, %v1130
      %v1135 = vmul.f32 %v1131, %v1110
      %v1136 = vmul.f32 %v1132, %v1110
      %v1137 = vmul.f32 %v1133, %v1110
      %v1138 = vmul.f32 %v1134, %v1110
      %v1139 = vmax.f32 %v1135, 0.0
      %v1140 = vmax.f32 %v1136, 0.0
      %v1141 = vmax.f32 %v1137, 0.0
      %v1142 = vmax.f32 %v1138, 0.0
      %v1143 = vadd.f32 %v1139, 1e-08
      %v1144 = vadd.f32 %v1140, 1e-08
      %v1145 = vadd.f32 %v1141, 1e-08
      %v1146 = vadd.f32 %v1142, 1e-08
      %v1147 = vrsqrt.pop %v1143
      %v1148 = vmul.f32 %v1143, %v1147
      %vm1149 = vcmp.eq.f32.partialorder %v1143, inf
      %v1150 = vsel %vm1149, %v1143, %v1148
      %vm1151 = vcmp.eq.f32.partialorder %v1143, 0.0
      %v1152 = vand.u32 %v1143, 2147483648
      %v1153 = vsel %vm1151, %v1152, %v1150
      %v1154 = vrsqrt.pop %v1144
      %v1155 = vmul.f32 %v1144, %v1154
      %vm1156 = vcmp.eq.f32.partialorder %v1144, inf
      %v1157 = vsel %vm1156, %v1144, %v1155
      %vm1158 = vcmp.eq.f32.partialorder %v1144, 0.0
      %v1159 = vand.u32 %v1144, 2147483648
      %v1160 = vsel %vm1158, %v1159, %v1157
      %v1161 = vrsqrt.pop %v1145
      %v1162 = vmul.f32 %v1145, %v1161
      %vm1163 = vcmp.eq.f32.partialorder %v1145, inf
      %v1164 = vsel %vm1163, %v1145, %v1162
      %vm1165 = vcmp.eq.f32.partialorder %v1145, 0.0
      %v1166 = vand.u32 %v1145, 2147483648
      %v1167 = vsel %vm1165, %v1166, %v1164
      %v1168 = vrsqrt.pop %v1146
      %v1169 = vmul.f32 %v1146, %v1168
      %vm1170 = vcmp.eq.f32.partialorder %v1146, inf
      %v1171 = vsel %vm1170, %v1146, %v1169
      %vm1172 = vcmp.eq.f32.partialorder %v1146, 0.0
      %v1173 = vand.u32 %v1146, 2147483648
      %v1174 = vsel %vm1172, %v1173, %v1171
      %v1175 = vld [vmem:[%s10] sm:$0xf]
      %v1176 = vld [vmem:[%s10 + $0x4] sm:$0xf]
      %v1177 = vld [vmem:[%s10 + $0x8] sm:$0xf]
      %v1178 = vld [vmem:[%s10 + $0xc] sm:$0xf]
      %v1179 = vld [vmem:[%s10 + $0x10] sm:$0xf]
      %v1180 = vld [vmem:[%s10 + $0x14] sm:$0xf]
      %v1181 = vld [vmem:[%s10 + $0x18] sm:$0xf]
      %v1182 = vld [vmem:[%s10 + $0x1c] sm:$0xf]
      %v1183 = vpack.c.bf16 %v1113, %v1112
      %v1184 = vpack.c.bf16 %v1115, %v1114
      %v1185 = vld [vmem:[%s11] sm:$0xf]
      %v1186 = vld [vmem:[%s11 + $0x4] sm:$0xf]
      %v1187 = vld [vmem:[%s11 + $0x8] sm:$0xf]
      %v1188 = vld [vmem:[%s11 + $0xc] sm:$0xf]
      %v1189 = vld [vmem:[%s11 + $0x10] sm:$0xf]
      %v1190 = vld [vmem:[%s11 + $0x14] sm:$0xf]
      %v1191 = vld [vmem:[%s11 + $0x18] sm:$0xf]
      %v1192 = vld [vmem:[%s11 + $0x1c] sm:$0xf]
      %v1193 = vpack.c.bf16 %v1160, %v1153
      %v1194 = vpack.c.bf16 %v1174, %v1167
      %v1203 = vunpack.c.l.b16 %v1185
      %v1204 = vunpack.c.l.b16 %v1186
      %v1205 = vunpack.c.l.b16 %v1187
      %v1206 = vunpack.c.l.b16 %v1188
      %v1207 = vunpack.c.l.b16 %v1189
      %v1208 = vunpack.c.l.b16 %v1190
      %v1209 = vunpack.c.l.b16 %v1191
      %v1210 = vunpack.c.l.b16 %v1192
      %v1211 = vpack.c.b16 %v1204, %v1203
      %v1212 = vpack.c.b16 %v1206, %v1205
      %v1213 = vpack.c.b16 %v1208, %v1207
      %v1214 = vpack.c.b16 %v1210, %v1209
      %v1216 = vsel %vm836, %v1211, 0
      %v1219 = vsel %vm836, %v1212, 0
      %v1222 = vsel %vm836, %v1213, 0
      %v1225 = vsel %vm836, %v1214, 0
      %1227 = vmatprep.subr.bf16.mxu0 0
      %1228 = vmatpush1.bf16.msra.mxu0 0
      %1229 = vmatprep.subr.bf16.mxu0 0
      %1230 = vmatpush1.bf16.msra.mxu0 0
      %1231 = vmatprep.subr.bf16.mxu0 0
      %1232 = vmatpush1.bf16.msra.mxu0 0
      %1233 = vmatprep.subr.bf16.mxu0 0
      %1234 = vmatpush1.bf16.msra.mxu0 0
      %1235 = vmatprep.subr.bf16.mxu0 0
      %1236 = vmatpush1.bf16.msra.mxu0 0
      %1237 = vmatprep.subr.bf16.mxu0 0
      %1238 = vmatpush1.bf16.msra.mxu0 0
      %1239 = vmatprep.subr.bf16.mxu0 0
      %1240 = vmatpush1.bf16.msra.mxu0 %v1194
      %1241 = vmatprep.subr.bf16.mxu0 0
      %1242 = vmatpush1.bf16.msra.mxu0 %v1193
      %1243 = vmatprep.subr.bf16.mxu0 0
      %1244 = vmatpush2.bf16.msra.mxu0 0
      %1245 = vmatprep.subr.bf16.mxu0 0
      %1246 = vmatpush2.bf16.msra.mxu0 0
      %1247 = vmatprep.subr.bf16.mxu0 0
      %1248 = vmatpush2.bf16.msra.mxu0 0
      %1249 = vmatprep.subr.bf16.mxu0 0
      %1250 = vmatpush2.bf16.msra.mxu0 0
      %1251 = vmatprep.subr.bf16.mxu0 0
      %1252 = vmatpush2.bf16.msra.mxu0 0
      %1253 = vmatprep.subr.bf16.mxu0 0
      %1254 = vmatpush2.bf16.msra.mxu0 0
      %1255 = vmatprep.subr.bf16.mxu0 0
      %1256 = vmatpush2.bf16.msra.mxu0 0
      %1257 = vmatprep.subr.bf16.mxu0 0
      %1258 = vmatpush2.bf16.msra.mxu0 0
      %1259 = vmatprep.mubr.bf16.mxu0 0
      %1260 = vmatmul.mubr.bf16.gmra.mxu0 %v1216
      %v1261 = vpop.f32.mrf.mxu0
      %v1262 = vadd.f32 0.0, %v1261
      %v1263 = vpop.f32.mrf.mxu0
      %v1264 = vpop.f32.mrf.mxu0
      %v1265 = vadd.f32 0.0, %v1264
      %v1266 = vpop.f32.mrf.mxu0
      %1267 = vmatprep.mubr.bf16.mxu0 0
      %1268 = vmatmul.mubr.bf16.gmra.mxu0 %v1219
      %v1269 = vpop.f32.mrf.mxu0
      %v1270 = vadd.f32 0.0, %v1269
      %v1271 = vpop.f32.mrf.mxu0
      %v1272 = vpop.f32.mrf.mxu0
      %v1273 = vadd.f32 0.0, %v1272
      %v1274 = vpop.f32.mrf.mxu0
      %1275 = vmatprep.mubr.bf16.mxu0 0
      %1276 = vmatmul.mubr.bf16.gmra.mxu0 %v1222
      %v1277 = vpop.f32.mrf.mxu0
      %v1278 = vadd.f32 0.0, %v1277
      %v1279 = vpop.f32.mrf.mxu0
      %v1280 = vpop.f32.mrf.mxu0
      %v1281 = vadd.f32 0.0, %v1280
      %v1282 = vpop.f32.mrf.mxu0
      %1283 = vmatprep.mubr.bf16.mxu0 0
      %1284 = vmatmul.mubr.bf16.gmra.mxu0 %v1225
      %v1285 = vpop.f32.mrf.mxu0
      %v1286 = vadd.f32 0.0, %v1285
      %v1287 = vpop.f32.mrf.mxu0
      %v1288 = vpop.f32.mrf.mxu0
      %v1289 = vadd.f32 0.0, %v1288
      %v1290 = vpop.f32.mrf.mxu0
      %1291 = vdwg.mxu0
      %v1300 = vunpack.c.l.b16 %v1175
      %v1301 = vunpack.c.l.b16 %v1176
      %v1302 = vunpack.c.l.b16 %v1177
      %v1303 = vunpack.c.l.b16 %v1178
      %v1304 = vunpack.c.l.b16 %v1179
      %v1305 = vunpack.c.l.b16 %v1180
      %v1306 = vunpack.c.l.b16 %v1181
      %v1307 = vunpack.c.l.b16 %v1182
      %v1308 = vpack.c.b16 %v1301, %v1300
      %v1309 = vpack.c.b16 %v1303, %v1302
      %v1310 = vpack.c.b16 %v1305, %v1304
      %v1311 = vpack.c.b16 %v1307, %v1306
      %v1313 = vsel %vm836, %v1308, 0
      %v1316 = vsel %vm836, %v1309, 0
      %v1319 = vsel %vm836, %v1310, 0
      %v1322 = vsel %vm836, %v1311, 0
      %1324 = vmatprep.subr.bf16.mxu0 0
      %1325 = vmatpush1.bf16.msra.mxu0 0
      %1326 = vmatprep.subr.bf16.mxu0 0
      %1327 = vmatpush1.bf16.msra.mxu0 0
      %1328 = vmatprep.subr.bf16.mxu0 0
      %1329 = vmatpush1.bf16.msra.mxu0 0
      %1330 = vmatprep.subr.bf16.mxu0 0
      %1331 = vmatpush1.bf16.msra.mxu0 0
      %1332 = vmatprep.subr.bf16.mxu0 0
      %1333 = vmatpush1.bf16.msra.mxu0 0
      %1334 = vmatprep.subr.bf16.mxu0 0
      %1335 = vmatpush1.bf16.msra.mxu0 0
      %1336 = vmatprep.subr.bf16.mxu0 0
      %1337 = vmatpush1.bf16.msra.mxu0 %v1184
      %1338 = vmatprep.subr.bf16.mxu0 0
      %1339 = vmatpush1.bf16.msra.mxu0 %v1183
      %1340 = vmatprep.subr.bf16.mxu0 0
      %1341 = vmatpush2.bf16.msra.mxu0 0
      %1342 = vmatprep.subr.bf16.mxu0 0
      %1343 = vmatpush2.bf16.msra.mxu0 0
      %1344 = vmatprep.subr.bf16.mxu0 0
      %1345 = vmatpush2.bf16.msra.mxu0 0
      %1346 = vmatprep.subr.bf16.mxu0 0
      %1347 = vmatpush2.bf16.msra.mxu0 0
      %1348 = vmatprep.subr.bf16.mxu0 0
      %1349 = vmatpush2.bf16.msra.mxu0 0
      %1350 = vmatprep.subr.bf16.mxu0 0
      %1351 = vmatpush2.bf16.msra.mxu0 0
      %1352 = vmatprep.subr.bf16.mxu0 0
      %1353 = vmatpush2.bf16.msra.mxu0 0
      %1354 = vmatprep.subr.bf16.mxu0 0
      %1355 = vmatpush2.bf16.msra.mxu0 0
      %1356 = vmatprep.mubr.bf16.mxu0 0
      %1357 = vmatmul.mubr.bf16.gmra.mxu0 %v1313
      %v1358 = vpop.f32.mrf.mxu0
      %v1359 = vadd.f32 %v1262, %v1358
      %v1360 = vpop.f32.mrf.mxu0
      %v1361 = vpop.f32.mrf.mxu0
      %v1362 = vadd.f32 %v1265, %v1361
      %v1363 = vpop.f32.mrf.mxu0
      %1364 = vmatprep.mubr.bf16.mxu0 0
      %1365 = vmatmul.mubr.bf16.gmra.mxu0 %v1316
      %v1366 = vpop.f32.mrf.mxu0
      %v1367 = vadd.f32 %v1270, %v1366
      %v1368 = vpop.f32.mrf.mxu0
      %v1369 = vpop.f32.mrf.mxu0
      %v1370 = vadd.f32 %v1273, %v1369
      %v1371 = vpop.f32.mrf.mxu0
      %1372 = vmatprep.mubr.bf16.mxu0 0
      %1373 = vmatmul.mubr.bf16.gmra.mxu0 %v1319
      %v1374 = vpop.f32.mrf.mxu0
      %v1375 = vadd.f32 %v1278, %v1374
      %v1376 = vpop.f32.mrf.mxu0
      %v1377 = vpop.f32.mrf.mxu0
      %v1378 = vadd.f32 %v1281, %v1377
      %v1379 = vpop.f32.mrf.mxu0
      %1380 = vmatprep.mubr.bf16.mxu0 0
      %1381 = vmatmul.mubr.bf16.gmra.mxu0 %v1322
      %v1382 = vpop.f32.mrf.mxu0
      %v1383 = vadd.f32 %v1286, %v1382
      %v1384 = vpop.f32.mrf.mxu0
      %v1385 = vpop.f32.mrf.mxu0
      %v1386 = vadd.f32 %v1289, %v1385
      %v1387 = vpop.f32.mrf.mxu0
      %1388 = vdwg.mxu0
      %vm1389 = vcmask 64512
      %v1390 = vsel %vm1389, %v1359, 0.0
      %v1391 = vsel %vm1389, %v1362, 0.0
      %v1392 = vadd.f32 %v1390, %v1391
      %v1393 = vsel %vm1389, %v1367, 0.0
      %v1394 = vadd.f32 %v1392, %v1393
      %v1395 = vsel %vm1389, %v1370, 0.0
      %v1396 = vadd.f32 %v1394, %v1395
      %v1397 = vsel %vm1389, %v1375, 0.0
      %v1398 = vadd.f32 %v1396, %v1397
      %v1399 = vsel %vm1389, %v1378, 0.0
      %v1400 = vadd.f32 %v1398, %v1399
      %v1401 = vsel %vm1389, %v1383, 0.0
      %v1402 = vadd.f32 %v1400, %v1401
      %v1403 = vsel %vm1389, %v1386, 0.0
      %v1404 = vadd.f32 %v1402, %v1403
      %v1405 = vrot.slane %v1404, 4
      %v1406 = vadd.f32 %v1404, %v1405
      %v1407 = vrot.slane %v1406, 2
      %v1408 = vadd.f32 %v1406, %v1407
      %v1409 = vrot.slane %v1408, 1
      %v1410 = vadd.f32 %v1408, %v1409
      %v1411 = vrcp.pop 64.0
      %v1412 = vmul.f32 %v1410, %v1411
      %v1413 = vsub.f32 %v1359, %v1412
      %v1414 = vsub.f32 %v1362, %v1412
      %v1415 = vsub.f32 %v1367, %v1412
      %v1416 = vsub.f32 %v1370, %v1412
      %v1417 = vsub.f32 %v1375, %v1412
      %v1418 = vsub.f32 %v1378, %v1412
      %v1419 = vsub.f32 %v1383, %v1412
      %v1420 = vsub.f32 %v1386, %v1412
      %v1421 = vmul.f32 %v1413, %v1413
      %v1422 = vmul.f32 %v1414, %v1414
      %v1423 = vmul.f32 %v1415, %v1415
      %v1424 = vmul.f32 %v1416, %v1416
      %v1425 = vmul.f32 %v1417, %v1417
      %v1426 = vmul.f32 %v1418, %v1418
      %v1427 = vmul.f32 %v1419, %v1419
      %v1428 = vmul.f32 %v1420, %v1420
      %v1429 = vsel %vm1389, %v1421, 0.0
      %v1430 = vsel %vm1389, %v1422, 0.0
      %v1431 = vadd.f32 %v1429, %v1430
      %v1432 = vsel %vm1389, %v1423, 0.0
      %v1433 = vadd.f32 %v1431, %v1432
      %v1434 = vsel %vm1389, %v1424, 0.0
      %v1435 = vadd.f32 %v1433, %v1434
      %v1436 = vsel %vm1389, %v1425, 0.0
      %v1437 = vadd.f32 %v1435, %v1436
      %v1438 = vsel %vm1389, %v1426, 0.0
      %v1439 = vadd.f32 %v1437, %v1438
      %v1440 = vsel %vm1389, %v1427, 0.0
      %v1441 = vadd.f32 %v1439, %v1440
      %v1442 = vsel %vm1389, %v1428, 0.0
      %v1443 = vadd.f32 %v1441, %v1442
      %v1444 = vrot.slane %v1443, 4
      %v1445 = vadd.f32 %v1443, %v1444
      %v1446 = vrot.slane %v1445, 2
      %v1447 = vadd.f32 %v1445, %v1446
      %v1448 = vrot.slane %v1447, 1
      %v1449 = vadd.f32 %v1447, %v1448
      %v1450 = vmul.f32 %v1449, %v1411
      %v1451 = vadd.f32 %v1450, 1e-05
      %v1452 = vrsqrt.pop %v1451
      %v1453 = vmul.f32 %v1413, %v1452
      %v1454 = vmul.f32 %v1414, %v1452
      %v1455 = vmul.f32 %v1415, %v1452
      %v1456 = vmul.f32 %v1416, %v1452
      %v1457 = vmul.f32 %v1417, %v1452
      %v1458 = vmul.f32 %v1418, %v1452
      %v1459 = vmul.f32 %v1419, %v1452
      %v1460 = vmul.f32 %v1420, %v1452
      %v1461 = vld [vmem:[%s12] sm:$0xff]
      %v1462 = vld [vmem:[%s12 + $0x8] sm:$0xff]
      %v1463 = vld [vmem:[%s12 + $0x10] sm:$0xff]
      %v1464 = vld [vmem:[%s12 + $0x18] sm:$0xff]
      %v1465 = vld [vmem:[%s12 + $0x20] sm:$0xff]
      %v1466 = vld [vmem:[%s12 + $0x28] sm:$0xff]
      %v1467 = vld [vmem:[%s12 + $0x30] sm:$0xff]
      %v1468 = vld [vmem:[%s12 + $0x38] sm:$0xff]
      %1470 = vset.pattern.permute.xlu0 0
      %1471 = vperm.xlu0 %1470, %v1461
      %v1472 = vpop.permute.xlu0 %1471
      %1475 = vset.pattern.permute.xlu0 0
      %1476 = vperm.xlu0 %1475, %v1462
      %v1477 = vpop.permute.xlu0 %1476
      %1480 = vset.pattern.permute.xlu0 0
      %1481 = vperm.xlu0 %1480, %v1463
      %v1482 = vpop.permute.xlu0 %1481
      %1485 = vset.pattern.permute.xlu0 0
      %1486 = vperm.xlu0 %1485, %v1464
      %v1487 = vpop.permute.xlu0 %1486
      %1490 = vset.pattern.permute.xlu0 0
      %1491 = vperm.xlu0 %1490, %v1465
      %v1492 = vpop.permute.xlu0 %1491
      %1495 = vset.pattern.permute.xlu0 0
      %1496 = vperm.xlu0 %1495, %v1466
      %v1497 = vpop.permute.xlu0 %1496
      %1500 = vset.pattern.permute.xlu0 0
      %1501 = vperm.xlu0 %1500, %v1467
      %v1502 = vpop.permute.xlu0 %1501
      %1505 = vset.pattern.permute.xlu0 0
      %1506 = vperm.xlu0 %1505, %v1468
      %v1507 = vpop.permute.xlu0 %1506
      %v1509 = vmul.f32 %v1453, %v1472
      %v1510 = vmul.f32 %v1454, %v1477
      %v1511 = vmul.f32 %v1455, %v1482
      %v1512 = vmul.f32 %v1456, %v1487
      %v1513 = vmul.f32 %v1457, %v1492
      %v1514 = vmul.f32 %v1458, %v1497
      %v1515 = vmul.f32 %v1459, %v1502
      %v1516 = vmul.f32 %v1460, %v1507
      %v1517 = vld [vmem:[%s13] sm:$0xff]
      %v1518 = vld [vmem:[%s13 + $0x8] sm:$0xff]
      %v1519 = vld [vmem:[%s13 + $0x10] sm:$0xff]
      %v1520 = vld [vmem:[%s13 + $0x18] sm:$0xff]
      %v1521 = vld [vmem:[%s13 + $0x20] sm:$0xff]
      %v1522 = vld [vmem:[%s13 + $0x28] sm:$0xff]
      %v1523 = vld [vmem:[%s13 + $0x30] sm:$0xff]
      %v1524 = vld [vmem:[%s13 + $0x38] sm:$0xff]
      %1526 = vset.pattern.permute.xlu0 0
      %1527 = vperm.xlu0 %1526, %v1517
      %v1528 = vpop.permute.xlu0 %1527
      %1531 = vset.pattern.permute.xlu0 0
      %1532 = vperm.xlu0 %1531, %v1518
      %v1533 = vpop.permute.xlu0 %1532
      %1536 = vset.pattern.permute.xlu0 0
      %1537 = vperm.xlu0 %1536, %v1519
      %v1538 = vpop.permute.xlu0 %1537
      %1541 = vset.pattern.permute.xlu0 0
      %1542 = vperm.xlu0 %1541, %v1520
      %v1543 = vpop.permute.xlu0 %1542
      %1546 = vset.pattern.permute.xlu0 0
      %1547 = vperm.xlu0 %1546, %v1521
      %v1548 = vpop.permute.xlu0 %1547
      %1551 = vset.pattern.permute.xlu0 0
      %1552 = vperm.xlu0 %1551, %v1522
      %v1553 = vpop.permute.xlu0 %1552
      %1556 = vset.pattern.permute.xlu0 0
      %1557 = vperm.xlu0 %1556, %v1523
      %v1558 = vpop.permute.xlu0 %1557
      %1561 = vset.pattern.permute.xlu0 0
      %1562 = vperm.xlu0 %1561, %v1524
      %v1563 = vpop.permute.xlu0 %1562
      %v1565 = vadd.f32 %v1509, %v1528
      %v1566 = vadd.f32 %v1510, %v1533
      %v1567 = vadd.f32 %v1511, %v1538
      %v1568 = vadd.f32 %v1512, %v1543
      %v1569 = vadd.f32 %v1513, %v1548
      %v1570 = vadd.f32 %v1514, %v1553
      %v1571 = vadd.f32 %v1515, %v1558
      %v1572 = vadd.f32 %v1516, %v1563
      %v1573 = vmax.f32 %v1565, 0.0
      %v1574 = vmax.f32 %v1566, 0.0
      %v1575 = vmax.f32 %v1567, 0.0
      %v1576 = vmax.f32 %v1568, 0.0
      %v1577 = vmax.f32 %v1569, 0.0
      %v1578 = vmax.f32 %v1570, 0.0
      %v1579 = vmax.f32 %v1571, 0.0
      %v1580 = vmax.f32 %v1572, 0.0
      %v1581 = vpack.c.bf16 %v1574, %v1573
      %v1582 = vpack.c.bf16 %v1576, %v1575
      %v1583 = vpack.c.bf16 %v1578, %v1577
      %v1584 = vpack.c.bf16 %v1580, %v1579
      %v1585 = vld [vmem:[%s14] sm:$0xf]
      %v1586 = vld [vmem:[%s14 + $0x4] sm:$0xf]
      %v1587 = vld [vmem:[%s14 + $0x8] sm:$0xf]
      %v1588 = vld [vmem:[%s14 + $0xc] sm:$0xf]
      %v1593 = vunpack.c.l.b16 %v1585
      %v1594 = vunpack.c.l.b16 %v1586
      %v1595 = vunpack.c.l.b16 %v1587
      %v1596 = vunpack.c.l.b16 %v1588
      %v1597 = vpack.c.b16 %v1594, %v1593
      %v1598 = vpack.c.b16 %v1596, %v1595
      %vm1599 = vcmask 523264
      %v1601 = vsel %vm1599, %v1597, 0
      %v1604 = vsel %vm1599, %v1598, 0
      %1606 = vmatprep.subr.bf16.mxu0 0
      %1607 = vmatpush1.bf16.msra.mxu0 0
      %1608 = vmatprep.subr.bf16.mxu0 0
      %1609 = vmatpush1.bf16.msra.mxu0 0
      %1610 = vmatprep.subr.bf16.mxu0 0
      %1611 = vmatpush1.bf16.msra.mxu0 0
      %1612 = vmatprep.subr.bf16.mxu0 0
      %1613 = vmatpush1.bf16.msra.mxu0 0
      %1614 = vmatprep.subr.bf16.mxu0 0
      %1615 = vmatpush1.bf16.msra.mxu0 %v1584
      %1616 = vmatprep.subr.bf16.mxu0 0
      %1617 = vmatpush1.bf16.msra.mxu0 %v1583
      %1618 = vmatprep.subr.bf16.mxu0 0
      %1619 = vmatpush1.bf16.msra.mxu0 %v1582
      %1620 = vmatprep.subr.bf16.mxu0 0
      %1621 = vmatpush1.bf16.msra.mxu0 %v1581
      %1622 = vmatprep.subr.bf16.mxu0 0
      %1623 = vmatpush2.bf16.msra.mxu0 0
      %1624 = vmatprep.subr.bf16.mxu0 0
      %1625 = vmatpush2.bf16.msra.mxu0 0
      %1626 = vmatprep.subr.bf16.mxu0 0
      %1627 = vmatpush2.bf16.msra.mxu0 0
      %1628 = vmatprep.subr.bf16.mxu0 0
      %1629 = vmatpush2.bf16.msra.mxu0 0
      %1630 = vmatprep.subr.bf16.mxu0 0
      %1631 = vmatpush2.bf16.msra.mxu0 0
      %1632 = vmatprep.subr.bf16.mxu0 0
      %1633 = vmatpush2.bf16.msra.mxu0 0
      %1634 = vmatprep.subr.bf16.mxu0 0
      %1635 = vmatpush2.bf16.msra.mxu0 0
      %1636 = vmatprep.subr.bf16.mxu0 0
      %1637 = vmatpush2.bf16.msra.mxu0 0
      %1638 = vmatprep.mubr.bf16.mxu0 0
      %1639 = vmatmul.mubr.bf16.gmra.mxu0 %v1601
      %v1640 = vpop.f32.mrf.mxu0
      %v1641 = vadd.f32 0.0, %v1640
      %v1642 = vpop.f32.mrf.mxu0
      %v1643 = vpop.f32.mrf.mxu0
      %v1644 = vadd.f32 0.0, %v1643
      %v1645 = vpop.f32.mrf.mxu0
      %1646 = vmatprep.mubr.bf16.mxu0 0
      %1647 = vmatmul.mubr.bf16.gmra.mxu0 %v1604
      %v1648 = vpop.f32.mrf.mxu0
      %v1649 = vadd.f32 0.0, %v1648
      %v1650 = vpop.f32.mrf.mxu0
      %v1651 = vpop.f32.mrf.mxu0
      %v1652 = vadd.f32 0.0, %v1651
      %v1653 = vpop.f32.mrf.mxu0
      %1654 = vdwg.mxu0
      %v1655 = vsel %vm1389, %v1641, 0.0
      %v1656 = vsel %vm1389, %v1644, 0.0
      %v1657 = vadd.f32 %v1655, %v1656
      %v1658 = vsel %vm1389, %v1649, 0.0
      %v1659 = vadd.f32 %v1657, %v1658
      %v1660 = vsel %vm1389, %v1652, 0.0
      %v1661 = vadd.f32 %v1659, %v1660
      %v1662 = vrot.slane %v1661, 4
      %v1663 = vadd.f32 %v1661, %v1662
      %v1664 = vrot.slane %v1663, 2
      %v1665 = vadd.f32 %v1663, %v1664
      %v1666 = vrot.slane %v1665, 1
      %v1667 = vadd.f32 %v1665, %v1666
      %v1668 = vmul.f32 %v1667, %v734
      %v1669 = vsub.f32 %v1641, %v1668
      %v1670 = vsub.f32 %v1644, %v1668
      %v1671 = vsub.f32 %v1649, %v1668
      %v1672 = vsub.f32 %v1652, %v1668
      %v1673 = vmul.f32 %v1669, %v1669
      %v1674 = vmul.f32 %v1670, %v1670
      %v1675 = vmul.f32 %v1671, %v1671
      %v1676 = vmul.f32 %v1672, %v1672
      %v1677 = vsel %vm1389, %v1673, 0.0
      %v1678 = vsel %vm1389, %v1674, 0.0
      %v1679 = vadd.f32 %v1677, %v1678
      %v1680 = vsel %vm1389, %v1675, 0.0
      %v1681 = vadd.f32 %v1679, %v1680
      %v1682 = vsel %vm1389, %v1676, 0.0
      %v1683 = vadd.f32 %v1681, %v1682
      %v1684 = vrot.slane %v1683, 4
      %v1685 = vadd.f32 %v1683, %v1684
      %v1686 = vrot.slane %v1685, 2
      %v1687 = vadd.f32 %v1685, %v1686
      %v1688 = vrot.slane %v1687, 1
      %v1689 = vadd.f32 %v1687, %v1688
      %v1690 = vmul.f32 %v1689, %v734
      %v1691 = vadd.f32 %v1690, 1e-05
      %v1692 = vrsqrt.pop %v1691
      %v1693 = vmul.f32 %v1669, %v1692
      %v1694 = vmul.f32 %v1670, %v1692
      %v1695 = vmul.f32 %v1671, %v1692
      %v1696 = vmul.f32 %v1672, %v1692
      %v1697 = vld [vmem:[%s15] sm:$0xff]
      %v1698 = vld [vmem:[%s15 + $0x8] sm:$0xff]
      %v1699 = vld [vmem:[%s15 + $0x10] sm:$0xff]
      %v1700 = vld [vmem:[%s15 + $0x18] sm:$0xff]
      %1702 = vset.pattern.permute.xlu0 0
      %1703 = vperm.xlu0 %1702, %v1697
      %v1704 = vpop.permute.xlu0 %1703
      %1707 = vset.pattern.permute.xlu0 0
      %1708 = vperm.xlu0 %1707, %v1698
      %v1709 = vpop.permute.xlu0 %1708
      %1712 = vset.pattern.permute.xlu0 0
      %1713 = vperm.xlu0 %1712, %v1699
      %v1714 = vpop.permute.xlu0 %1713
      %1717 = vset.pattern.permute.xlu0 0
      %1718 = vperm.xlu0 %1717, %v1700
      %v1719 = vpop.permute.xlu0 %1718
      %v1721 = vmul.f32 %v1693, %v1704
      %v1722 = vmul.f32 %v1694, %v1709
      %v1723 = vmul.f32 %v1695, %v1714
      %v1724 = vmul.f32 %v1696, %v1719
      %v1725 = vld [vmem:[%s16] sm:$0xff]
      %v1726 = vld [vmem:[%s16 + $0x8] sm:$0xff]
      %v1727 = vld [vmem:[%s16 + $0x10] sm:$0xff]
      %v1728 = vld [vmem:[%s16 + $0x18] sm:$0xff]
      %1730 = vset.pattern.permute.xlu0 0
      %1731 = vperm.xlu0 %1730, %v1725
      %v1732 = vpop.permute.xlu0 %1731
      %1735 = vset.pattern.permute.xlu0 0
      %1736 = vperm.xlu0 %1735, %v1726
      %v1737 = vpop.permute.xlu0 %1736
      %1740 = vset.pattern.permute.xlu0 0
      %1741 = vperm.xlu0 %1740, %v1727
      %v1742 = vpop.permute.xlu0 %1741
      %1745 = vset.pattern.permute.xlu0 0
      %1746 = vperm.xlu0 %1745, %v1728
      %v1747 = vpop.permute.xlu0 %1746
      %v1749 = vadd.f32 %v1721, %v1732
      %v1750 = vadd.f32 %v1722, %v1737
      %v1751 = vadd.f32 %v1723, %v1742
      %v1752 = vadd.f32 %v1724, %v1747
      %v1753 = vmax.f32 %v1749, 0.0
      %v1754 = vmax.f32 %v1750, 0.0
      %v1755 = vmax.f32 %v1751, 0.0
      %v1756 = vmax.f32 %v1752, 0.0
      %1757 = vst.msk [vmem:[%s628] sm:$0xff] %vm1389, %v1753
      %1758 = vst.msk [vmem:[%s628 + $0x8] sm:$0xff] %vm1389, %v1754
      %1759 = vst.msk [vmem:[%s628 + $0x10] sm:$0xff] %vm1389, %v1755
      %1760 = vst.msk [vmem:[%s628 + $0x18] sm:$0xff] %vm1389, %v1756
      %p1761 = scmp.lt.s32.totalorder %s32, 1
      %s1762 = scalar_select %p1761, %s32, 1
      %p1763 = scmp.lt.s32.totalorder %s33, 0
      %s1764 = scalar_select %p1763, %s33, 0
      %s1765 = smul.addr %s1764, 4
      %s1766 = smul.addr %s1762, 4
      %s1767 = sadd.s32 %s1765, %s1766
      %s1768 = smul.addr %s1767, 8
      %s1769 = scalar_lea.vmem %s17, %s1768
      // Predicated region
      $region89: #{tpu_custom_call.1} parent=87 // pred_check
        %p1770 = pneg %p438
      $region90: #{tpu_custom_call.1} parent=87 // pred_check_branch
        %1772 = sbr.rel (%p1770) target = $region92
      $region91: #{tpu_custom_call.1} parent=87 // pred_region
        _
      $region92: #{tpu_custom_call.1} parent=87 // pred_fallthru
        _
    $region88: #{tpu_custom_call.1} parent=5 // pred_fallthru
      _
    %p1773 = scmp.le.s32.totalorder 2, %s23
    // Predicated region
    $region93: #{tpu_custom_call.1} parent=5 // pred_check
      %p1774 = pneg %p1773
    $region94: #{tpu_custom_call.1} parent=5 // pred_check_branch
      %1776 = sbr.rel (%p1774) target = $region96
    $region95: #{tpu_custom_call.1} parent=5 // pred_region
      %s1777 = ssub.s32 %s23, 2
      // Predicated region
      $region97: #{tpu_custom_call.1} parent=95 // pred_check
        %p1778 = pneg %p444
      $region98: #{tpu_custom_call.1} parent=95 // pred_check_branch
        %1780 = sbr.rel (%p1778) target = $region100
      $region99: #{tpu_custom_call.1} parent=95 // pred_region
        %p1781 = scmp.lt.s32.totalorder %s34, 1
        %s1782 = scalar_select %p1781, %s34, 1
        %p1783 = scmp.lt.s32.totalorder %s35, 0
        %s1784 = scalar_select %p1783, %s35, 0
        %s1785 = smul.addr %s1784, 4
        %s1786 = smul.addr %s1782, 4
        %s1787 = sadd.s32 %s1785, %s1786
        %s1788 = smul.addr %s1787, 8
        %s1789 = scalar_lea.vmem %s17, %s1788
      $region100: #{tpu_custom_call.1} parent=95 // pred_fallthru
        _
    $region96: #{tpu_custom_call.1} parent=5 // pred_fallthru
      _
  $region6: #{tpu_custom_call.1} parent=0 // loop_footer
    %s27 = sadd.s32 1, %s23
  $region7: #{tpu_custom_call.1} parent=0 // loop_footer_branch
    %22 = sbr.rel target = $region3
  $region8: #{tpu_custom_call.1} parent=0 // loop_exit
    _

</llo_original>
